<compile_context>
chip_gen: v6e
topology: v6e:2x2x1
jax: 0.10.0
libtpu: 0.0.40
codegen_flags: <defaults>
</compile_context>

<pallas_src>
import functools

import numpy as np
import jax
import jax.numpy as jnp
from jax.experimental import pallas as pl
from jax.experimental.pallas import tpu as pltpu

EXPANSION = 2
EPS = 1e-5


# ------------------------------- Pallas kernel -------------------------------

def _bottleneck_kernel(x_ref, m_ref, s1_ref, t1_ref, w1_ref, b1_ref,
                       w2_ref, b2_ref, w3_ref, b3_ref, o_ref, *, W):
    """Fused Bottleneck2D forward for one image, channels-first (C, H*W)."""
    x = x_ref[0]                                              # (Cin, M) f32
    M = x.shape[-1]

    # bn1 (eval, folded to scale/shift) + relu
    a1 = jnp.maximum(x * s1_ref[...] + t1_ref[...], 0.0)

    # conv1 (1x1) with bn2 folded into (w1, b1), then relu   -> (P, M)
    y = jnp.dot(w1_ref[...], a1.astype(jnp.bfloat16),
                preferred_element_type=jnp.float32) + b1_ref[...]
    y = jnp.maximum(y, 0.0)

    # conv2 (3x3, pad=1) with bn3 folded: 9 shifted + masked MXU dots.
    # Tap (kh, kw) reads input pixel (h+kh-1, w+kw-1)  ==  flattened m + off.
    acc = jnp.zeros_like(y)
    for kh in range(3):
        for kw in range(3):
            k = kh * 3 + kw
            off = (kh - 1) * W + (kw - 1)
            shifted = y if off == 0 else pltpu.roll(y, shift=(-off) % M, axis=1)
            shifted = shifted * m_ref[k]                      # zero padding taps
            acc = acc + jnp.dot(w2_ref[k], shifted.astype(jnp.bfloat16),
                                preferred_element_type=jnp.float32)
    z = jnp.maximum(acc + b2_ref[...], 0.0)

    # conv3 (1x1) + bias + identity residual
    out = jnp.dot(w3_ref[...], z.astype(jnp.bfloat16),
                  preferred_element_type=jnp.float32) + b3_ref[...] + x
    o_ref[0] = out


# --------------------------------- wrappers ----------------------------------

def _fold_bn(gamma, beta, mean, var):
    s = gamma / jnp.sqrt(var + EPS)
    t = beta - mean * s
    return s, t


def _conv3x3_masks(H, W):
    """Per-tap validity masks (9, 1, H*W): 1.0 inside the image, 0.0 at padding."""
    M = H * W
    r = np.arange(M) // W
    c = np.arange(M) % W
    masks = np.zeros((9, 1, M), np.float32)
    for kh in range(3):
        for kw in range(3):
            rs, cs = r + kh - 1, c + kw - 1
            valid = (rs >= 0) & (rs < H) & (cs >= 0) & (cs < W)
            masks[kh * 3 + kw, 0, :] = valid.astype(np.float32)
    return jnp.asarray(masks)


def _prepare_kernel_params(p):
    """Fold eval-mode BN and cast matmul weights to bf16 (biases/scales stay f32)."""
    s1, t1 = _fold_bn(*p["bn1"])
    s2, t2 = _fold_bn(*p["bn2"])
    s3, t3 = _fold_bn(*p["bn3"])
    # conv1 -> bn2 (no nonlinearity in between): fold bn2 into conv1.
    w1f = p["conv1_w"] * s2[:, None]
    b1f = p["conv1_b"] * s2 + t2
    # conv2 -> bn3: fold bn3 into conv2.
    w2f = p["conv2_w"] * s3[:, None, None, None]              # (O, I, 3, 3)
    b2f = p["conv2_b"] * s3 + t3
    # (O, I, kh, kw) -> (kh*3+kw, O, I) to match the in-kernel tap order.
    O, I = p["conv2_w"].shape[:2]
    w2k = jnp.transpose(w2f, (2, 3, 0, 1)).reshape(9, O, I)
    return dict(
        s1=s1[:, None].astype(jnp.float32), t1=t1[:, None].astype(jnp.float32),
        w1=w1f.astype(jnp.bfloat16),        b1=b1f[:, None].astype(jnp.float32),
        w2=w2k.astype(jnp.bfloat16),        b2=b2f[:, None].astype(jnp.float32),
        w3=p["conv3_w"].astype(jnp.bfloat16),
        b3=p["conv3_b"][:, None].astype(jnp.float32),
    )


def bottleneck2d_forward(x_nchw, params):
    """x_nchw: (N, inplanes, H, W) with inplanes == planes * EXPANSION."""
    kp = _prepare_kernel_params(params)
    N, Cin, H, W = x_nchw.shape
    M = H * W
    P = kp["w1"].shape[0]
    Cout = kp["w3"].shape[0]

    x3 = x_nchw.reshape(N, Cin, M)                            # free reshape, lane dim = M
    masks = _conv3x3_masks(H, W)
    kernel = functools.partial(_bottleneck_kernel, W=W)

    out = pl.pallas_call(
        kernel,
        out_shape=jax.ShapeDtypeStruct((N, Cout, M), jnp.float32),
        grid=(N,),
        in_specs=[
            pl.BlockSpec((1, Cin, M), lambda b: (b, 0, 0)),   # x (per-image block)
            pl.BlockSpec((9, 1, M), lambda b: (0, 0, 0)),     # 3x3 validity masks
            pl.BlockSpec((Cin, 1), lambda b: (0, 0)),         # bn1 scale
            pl.BlockSpec((Cin, 1), lambda b: (0, 0)),         # bn1 shift
            pl.BlockSpec((P, Cin), lambda b: (0, 0)),         # w1 (bn2 folded)
            pl.BlockSpec((P, 1), lambda b: (0, 0)),           # b1 (bn2 folded)
            pl.BlockSpec((9, P, P), lambda b: (0, 0, 0)),     # w2 taps (bn3 folded)
            pl.BlockSpec((P, 1), lambda b: (0, 0)),           # b2 (bn3 folded)
            pl.BlockSpec((Cout, P), lambda b: (0, 0)),        # w3
            pl.BlockSpec((Cout, 1), lambda b: (0, 0)),        # b3
        ],
        out_specs=pl.BlockSpec((1, Cout, M), lambda b: (b, 0, 0)),
        compiler_params=pltpu.CompilerParams(dimension_semantics=("parallel",)),
    )(x3, masks, kp["s1"], kp["t1"], kp["w1"], kp["b1"],
      kp["w2"], kp["b2"], kp["w3"], kp["b3"])
    return out.reshape(N, Cout, H, W)


# ------------------------- pure-JAX reference (f32) ---------------------------

def bottleneck2d_reference(x, p):
    def bn(v, bp):
        g, b, m, var = bp
        s = g / jnp.sqrt(var + EPS)
        t = b - m * s
        return v * s[None, :, None, None] + t[None, :, None, None]

    def conv1x1(v, w, b):
        return jnp.einsum("nchw,oc->nohw", v, w) + b[None, :, None, None]

    def conv3x3(v, w, b):
        out = jax.lax.conv_general_dilated(
            v, w, window_strides=(1, 1), padding=((1, 1), (1, 1)),
            dimension_numbers=("NCHW", "OIHW", "NCHW"))
        return out + b[None, :, None, None]

    out = jnp.maximum(bn(x, p["bn1"]), 0.0)
    out = conv1x1(out, p["conv1_w"], p["conv1_b"])
    out = jnp.maximum(bn(out, p["bn2"]), 0.0)
    out = conv3x3(out, p["conv2_w"], p["conv2_b"])
    out = jnp.maximum(bn(out, p["bn3"]), 0.0)
    out = conv1x1(out, p["conv3_w"], p["conv3_b"])
    return out + x


# ------------------------------ parameter init --------------------------------

def init_params(key, inplanes, planes):
    def bn_params(k, c):
        k1, k2, k3, k4 = jax.random.split(k, 4)
        gamma = 1.0 + 0.1 * jax.random.normal(k1, (c,), jnp.float32)
        beta = 0.1 * jax.random.normal(k2, (c,), jnp.float32)
        mean = 0.1 * jax.random.normal(k3, (c,), jnp.float32)
        var = jax.random.uniform(k4, (c,), jnp.float32, 0.5, 1.5)
        return (gamma, beta, mean, var)

    ks = jax.random.split(key, 9)
    return dict(
        bn1=bn_params(ks[0], inplanes),
        conv1_w=0.1 * jax.random.normal(ks[1], (planes, inplanes), jnp.float32),
        conv1_b=0.05 * jax.random.normal(ks[2], (planes,), jnp.float32),
        bn2=bn_params(ks[3], planes),
        conv2_w=0.1 * jax.random.normal(ks[4], (planes, planes, 3, 3), jnp.float32),
        conv2_b=0.05 * jax.random.normal(ks[5], (planes,), jnp.float32),
        bn3=bn_params(ks[6], planes),
        conv3_w=0.1 * jax.random.normal(ks[7], (planes * EXPANSION, planes), jnp.float32),
        conv3_b=0.05 * jax.random.normal(ks[8], (planes * EXPANSION,), jnp.float32),
    )


# ------------------------------------ main ------------------------------------

if __name__ == "__main__":
    planes = 4
    inplanes = planes * EXPANSION     # identity residual requires inplanes == 2*planes
    N, H, W = 2, 16, 16

    key = jax.random.PRNGKey(0)
    kx, kp = jax.random.split(key)
    x = jax.random.normal(kx, (N, inplanes, H, W), jnp.float32)   # NCHW like PyTorch
    params = init_params(kp, inplanes, planes)

    fwd = jax.jit(bottleneck2d_forward)
    out = fwd(x, params)
    jax.block_until_ready(out)

    assert out.shape == (N, planes * EXPANSION, H, W), out.shape
    assert bool(jnp.all(jnp.isfinite(out)))

    ref = bottleneck2d_reference(x, params)
    max_err = float(jnp.max(jnp.abs(out - ref)))
    assert max_err < 5e-2, f"max abs error {max_err}"   # slack for bf16 MXU operands

    print("KERNEL_OK")
</pallas_src>

<mosaic_0001>
module attributes {stable_mosaic.version = 11 : i64} {
  func.func @_bottleneck_kernel(%arg0: i32, %arg1: memref<1x8x256xf32, #tpu.memory_space<vmem>>, %arg2: memref<9x1x256xf32, #tpu.memory_space<vmem>>, %arg3: memref<8x1xf32, #tpu.memory_space<vmem>>, %arg4: memref<8x1xf32, #tpu.memory_space<vmem>>, %arg5: memref<4x8xbf16, #tpu.memory_space<vmem>>, %arg6: memref<4x1xf32, #tpu.memory_space<vmem>>, %arg7: memref<9x4x4xbf16, #tpu.memory_space<vmem>>, %arg8: memref<4x1xf32, #tpu.memory_space<vmem>>, %arg9: memref<8x4xbf16, #tpu.memory_space<vmem>>, %arg10: memref<8x1xf32, #tpu.memory_space<vmem>>, %arg11: memref<1x8x256xf32, #tpu.memory_space<vmem>>) attributes {dimension_semantics = [#tpu.dimension_semantics<parallel>], iteration_bounds = array<i64: 2>, scalar_prefetch = 0 : i64, scratch_operands = 0 : i64, tpu.core_type = #tpu.core_type<tc>, window_params = [{transform_indices = @transform_0, window_bounds = array<i64: 1, 8, 256>}, {pipeline_mode = #tpu.pipeline_mode<synchronous>, transform_indices = @transform_1, window_bounds = array<i64: 9, 1, 256>}, {pipeline_mode = #tpu.pipeline_mode<synchronous>, transform_indices = @transform_2, window_bounds = array<i64: 8, 1>}, {pipeline_mode = #tpu.pipeline_mode<synchronous>, transform_indices = @transform_3, window_bounds = array<i64: 8, 1>}, {pipeline_mode = #tpu.pipeline_mode<synchronous>, transform_indices = @transform_4, window_bounds = array<i64: 4, 8>}, {pipeline_mode = #tpu.pipeline_mode<synchronous>, transform_indices = @transform_5, window_bounds = array<i64: 4, 1>}, {pipeline_mode = #tpu.pipeline_mode<synchronous>, transform_indices = @transform_6, window_bounds = array<i64: 9, 4, 4>}, {pipeline_mode = #tpu.pipeline_mode<synchronous>, transform_indices = @transform_7, window_bounds = array<i64: 4, 1>}, {pipeline_mode = #tpu.pipeline_mode<synchronous>, transform_indices = @transform_8, window_bounds = array<i64: 8, 4>}, {pipeline_mode = #tpu.pipeline_mode<synchronous>, transform_indices = @transform_9, window_bounds = array<i64: 8, 1>}, {transform_indices = @transform_10, window_bounds = array<i64: 1, 8, 256>}]} {
    %c0 = arith.constant 0 : index
    %c0_0 = arith.constant 0 : index
    %c0_1 = arith.constant 0 : index
    %0 = vector.load %arg1[%c0, %c0_0, %c0_1] : memref<1x8x256xf32, #tpu.memory_space<vmem>>, vector<1x8x256xf32>
    %1 = vector.shape_cast %0 : vector<1x8x256xf32> to vector<8x256xf32>
    %c0_2 = arith.constant 0 : index
    %c0_3 = arith.constant 0 : index
    %2 = vector.load %arg3[%c0_2, %c0_3] : memref<8x1xf32, #tpu.memory_space<vmem>>, vector<8x1xf32>
    %3 = vector.broadcast %2 : vector<8x1xf32> to vector<8x256xf32>
    %4 = arith.mulf %1, %3 : vector<8x256xf32>
    %c0_4 = arith.constant 0 : index
    %c0_5 = arith.constant 0 : index
    %5 = vector.load %arg4[%c0_4, %c0_5] : memref<8x1xf32, #tpu.memory_space<vmem>>, vector<8x1xf32>
    %6 = vector.broadcast %5 : vector<8x1xf32> to vector<8x256xf32>
    %7 = arith.addf %4, %6 : vector<8x256xf32>
    %cst = arith.constant 0.000000e+00 : f32
    %8 = vector.broadcast %cst : f32 to vector<8x256xf32>
    %9 = arith.maximumf %7, %8 : vector<8x256xf32>
    %c0_6 = arith.constant 0 : index
    %c0_7 = arith.constant 0 : index
    %10 = vector.load %arg5[%c0_6, %c0_7] : memref<4x8xbf16, #tpu.memory_space<vmem>>, vector<4x8xbf16>
    %11 = arith.truncf %9 : vector<8x256xf32> to vector<8x256xbf16>
    %cst_8 = arith.constant dense<0.000000e+00> : vector<4x256xf32>
    %12 = tpu.matmul %10, %11, %cst_8 {dimension_numbers = #tpu.dot_dimension_numbers<[1], [0], [0], [1], [0, 0, 1, 1], [], []>} : vector<4x8xbf16>, vector<8x256xbf16>, vector<4x256xf32> -> vector<4x256xf32>
    %c0_9 = arith.constant 0 : index
    %c0_10 = arith.constant 0 : index
    %13 = vector.load %arg6[%c0_9, %c0_10] : memref<4x1xf32, #tpu.memory_space<vmem>>, vector<4x1xf32>
    %14 = vector.broadcast %13 : vector<4x1xf32> to vector<4x256xf32>
    %15 = arith.addf %12, %14 : vector<4x256xf32>
    %cst_11 = arith.constant 0.000000e+00 : f32
    %16 = vector.broadcast %cst_11 : f32 to vector<4x256xf32>
    %17 = arith.maximumf %15, %16 : vector<4x256xf32>
    %cst_12 = arith.constant 0.000000e+00 : f32
    %18 = vector.broadcast %cst_12 : f32 to vector<4x256xf32>
    %c17_i32 = arith.constant 17 : i32
    %19 = tpu.dynamic_rotate %17 by %c17_i32 dim 1 : vector<4x256xf32>, i32 -> vector<4x256xf32>
    %c0_13 = arith.constant 0 : index
    %c0_14 = arith.constant 0 : index
    %c0_15 = arith.constant 0 : index
    %20 = vector.load %arg2[%c0_13, %c0_14, %c0_15] : memref<9x1x256xf32, #tpu.memory_space<vmem>>, vector<1x1x256xf32>
    %21 = vector.shape_cast %20 : vector<1x1x256xf32> to vector<1x256xf32>
    %22 = vector.broadcast %21 : vector<1x256xf32> to vector<4x256xf32>
    %23 = arith.mulf %19, %22 : vector<4x256xf32>
    %c0_16 = arith.constant 0 : index
    %c0_17 = arith.constant 0 : index
    %c0_18 = arith.constant 0 : index
    %24 = vector.load %arg7[%c0_16, %c0_17, %c0_18] : memref<9x4x4xbf16, #tpu.memory_space<vmem>>, vector<1x4x4xbf16>
    %25 = vector.shape_cast %24 : vector<1x4x4xbf16> to vector<4x4xbf16>
    %26 = arith.truncf %23 : vector<4x256xf32> to vector<4x256xbf16>
    %cst_19 = arith.constant dense<0.000000e+00> : vector<4x256xf32>
    %27 = tpu.matmul %25, %26, %cst_19 {dimension_numbers = #tpu.dot_dimension_numbers<[1], [0], [0], [1], [0, 0, 1, 1], [], []>} : vector<4x4xbf16>, vector<4x256xbf16>, vector<4x256xf32> -> vector<4x256xf32>
    %28 = arith.addf %18, %27 : vector<4x256xf32>
    %c16_i32 = arith.constant 16 : i32
    %29 = tpu.dynamic_rotate %17 by %c16_i32 dim 1 : vector<4x256xf32>, i32 -> vector<4x256xf32>
    %c1 = arith.constant 1 : index
    %c0_20 = arith.constant 0 : index
    %c0_21 = arith.constant 0 : index
    %30 = vector.load %arg2[%c1, %c0_20, %c0_21] : memref<9x1x256xf32, #tpu.memory_space<vmem>>, vector<1x1x256xf32>
    %31 = vector.shape_cast %30 : vector<1x1x256xf32> to vector<1x256xf32>
    %32 = vector.broadcast %31 : vector<1x256xf32> to vector<4x256xf32>
    %33 = arith.mulf %29, %32 : vector<4x256xf32>
    %c1_22 = arith.constant 1 : index
    %c0_23 = arith.constant 0 : index
    %c0_24 = arith.constant 0 : index
    %34 = vector.load %arg7[%c1_22, %c0_23, %c0_24] : memref<9x4x4xbf16, #tpu.memory_space<vmem>>, vector<1x4x4xbf16>
    %35 = vector.shape_cast %34 : vector<1x4x4xbf16> to vector<4x4xbf16>
    %36 = arith.truncf %33 : vector<4x256xf32> to vector<4x256xbf16>
    %cst_25 = arith.constant dense<0.000000e+00> : vector<4x256xf32>
    %37 = tpu.matmul %35, %36, %cst_25 {dimension_numbers = #tpu.dot_dimension_numbers<[1], [0], [0], [1], [0, 0, 1, 1], [], []>} : vector<4x4xbf16>, vector<4x256xbf16>, vector<4x256xf32> -> vector<4x256xf32>
    %38 = arith.addf %28, %37 : vector<4x256xf32>
    %c15_i32 = arith.constant 15 : i32
    %39 = tpu.dynamic_rotate %17 by %c15_i32 dim 1 : vector<4x256xf32>, i32 -> vector<4x256xf32>
    %c2 = arith.constant 2 : index
    %c0_26 = arith.constant 0 : index
    %c0_27 = arith.constant 0 : index
    %40 = vector.load %arg2[%c2, %c0_26, %c0_27] : memref<9x1x256xf32, #tpu.memory_space<vmem>>, vector<1x1x256xf32>
    %41 = vector.shape_cast %40 : vector<1x1x256xf32> to vector<1x256xf32>
    %42 = vector.broadcast %41 : vector<1x256xf32> to vector<4x256xf32>
    %43 = arith.mulf %39, %42 : vector<4x256xf32>
    %c2_28 = arith.constant 2 : index
    %c0_29 = arith.constant 0 : index
    %c0_30 = arith.constant 0 : index
    %44 = vector.load %arg7[%c2_28, %c0_29, %c0_30] : memref<9x4x4xbf16, #tpu.memory_space<vmem>>, vector<1x4x4xbf16>
    %45 = vector.shape_cast %44 : vector<1x4x4xbf16> to vector<4x4xbf16>
    %46 = arith.truncf %43 : vector<4x256xf32> to vector<4x256xbf16>
    %cst_31 = arith.constant dense<0.000000e+00> : vector<4x256xf32>
    %47 = tpu.matmul %45, %46, %cst_31 {dimension_numbers = #tpu.dot_dimension_numbers<[1], [0], [0], [1], [0, 0, 1, 1], [], []>} : vector<4x4xbf16>, vector<4x256xbf16>, vector<4x256xf32> -> vector<4x256xf32>
    %48 = arith.addf %38, %47 : vector<4x256xf32>
    %c1_i32 = arith.constant 1 : i32
    %49 = tpu.dynamic_rotate %17 by %c1_i32 dim 1 : vector<4x256xf32>, i32 -> vector<4x256xf32>
    %c3 = arith.constant 3 : index
    %c0_32 = arith.constant 0 : index
    %c0_33 = arith.constant 0 : index
    %50 = vector.load %arg2[%c3, %c0_32, %c0_33] : memref<9x1x256xf32, #tpu.memory_space<vmem>>, vector<1x1x256xf32>
    %51 = vector.shape_cast %50 : vector<1x1x256xf32> to vector<1x256xf32>
    %52 = vector.broadcast %51 : vector<1x256xf32> to vector<4x256xf32>
    %53 = arith.mulf %49, %52 : vector<4x256xf32>
    %c3_34 = arith.constant 3 : index
    %c0_35 = arith.constant 0 : index
    %c0_36 = arith.constant 0 : index
    %54 = vector.load %arg7[%c3_34, %c0_35, %c0_36] : memref<9x4x4xbf16, #tpu.memory_space<vmem>>, vector<1x4x4xbf16>
    %55 = vector.shape_cast %54 : vector<1x4x4xbf16> to vector<4x4xbf16>
    %56 = arith.truncf %53 : vector<4x256xf32> to vector<4x256xbf16>
    %cst_37 = arith.constant dense<0.000000e+00> : vector<4x256xf32>
    %57 = tpu.matmul %55, %56, %cst_37 {dimension_numbers = #tpu.dot_dimension_numbers<[1], [0], [0], [1], [0, 0, 1, 1], [], []>} : vector<4x4xbf16>, vector<4x256xbf16>, vector<4x256xf32> -> vector<4x256xf32>
    %58 = arith.addf %48, %57 : vector<4x256xf32>
    %c4 = arith.constant 4 : index
    %c0_38 = arith.constant 0 : index
    %c0_39 = arith.constant 0 : index
    %59 = vector.load %arg2[%c4, %c0_38, %c0_39] : memref<9x1x256xf32, #tpu.memory_space<vmem>>, vector<1x1x256xf32>
    %60 = vector.shape_cast %59 : vector<1x1x256xf32> to vector<1x256xf32>
    %61 = vector.broadcast %60 : vector<1x256xf32> to vector<4x256xf32>
    %62 = arith.mulf %17, %61 : vector<4x256xf32>
    %c4_40 = arith.constant 4 : index
    %c0_41 = arith.constant 0 : index
    %c0_42 = arith.constant 0 : index
    %63 = vector.load %arg7[%c4_40, %c0_41, %c0_42] : memref<9x4x4xbf16, #tpu.memory_space<vmem>>, vector<1x4x4xbf16>
    %64 = vector.shape_cast %63 : vector<1x4x4xbf16> to vector<4x4xbf16>
    %65 = arith.truncf %62 : vector<4x256xf32> to vector<4x256xbf16>
    %cst_43 = arith.constant dense<0.000000e+00> : vector<4x256xf32>
    %66 = tpu.matmul %64, %65, %cst_43 {dimension_numbers = #tpu.dot_dimension_numbers<[1], [0], [0], [1], [0, 0, 1, 1], [], []>} : vector<4x4xbf16>, vector<4x256xbf16>, vector<4x256xf32> -> vector<4x256xf32>
    %67 = arith.addf %58, %66 : vector<4x256xf32>
    %c255_i32 = arith.constant 255 : i32
    %68 = tpu.dynamic_rotate %17 by %c255_i32 dim 1 : vector<4x256xf32>, i32 -> vector<4x256xf32>
    %c5 = arith.constant 5 : index
    %c0_44 = arith.constant 0 : index
    %c0_45 = arith.constant 0 : index
    %69 = vector.load %arg2[%c5, %c0_44, %c0_45] : memref<9x1x256xf32, #tpu.memory_space<vmem>>, vector<1x1x256xf32>
    %70 = vector.shape_cast %69 : vector<1x1x256xf32> to vector<1x256xf32>
    %71 = vector.broadcast %70 : vector<1x256xf32> to vector<4x256xf32>
    %72 = arith.mulf %68, %71 : vector<4x256xf32>
    %c5_46 = arith.constant 5 : index
    %c0_47 = arith.constant 0 : index
    %c0_48 = arith.constant 0 : index
    %73 = vector.load %arg7[%c5_46, %c0_47, %c0_48] : memref<9x4x4xbf16, #tpu.memory_space<vmem>>, vector<1x4x4xbf16>
    %74 = vector.shape_cast %73 : vector<1x4x4xbf16> to vector<4x4xbf16>
    %75 = arith.truncf %72 : vector<4x256xf32> to vector<4x256xbf16>
    %cst_49 = arith.constant dense<0.000000e+00> : vector<4x256xf32>
    %76 = tpu.matmul %74, %75, %cst_49 {dimension_numbers = #tpu.dot_dimension_numbers<[1], [0], [0], [1], [0, 0, 1, 1], [], []>} : vector<4x4xbf16>, vector<4x256xbf16>, vector<4x256xf32> -> vector<4x256xf32>
    %77 = arith.addf %67, %76 : vector<4x256xf32>
    %c241_i32 = arith.constant 241 : i32
    %78 = tpu.dynamic_rotate %17 by %c241_i32 dim 1 : vector<4x256xf32>, i32 -> vector<4x256xf32>
    %c6 = arith.constant 6 : index
    %c0_50 = arith.constant 0 : index
    %c0_51 = arith.constant 0 : index
    %79 = vector.load %arg2[%c6, %c0_50, %c0_51] : memref<9x1x256xf32, #tpu.memory_space<vmem>>, vector<1x1x256xf32>
    %80 = vector.shape_cast %79 : vector<1x1x256xf32> to vector<1x256xf32>
    %81 = vector.broadcast %80 : vector<1x256xf32> to vector<4x256xf32>
    %82 = arith.mulf %78, %81 : vector<4x256xf32>
    %c6_52 = arith.constant 6 : index
    %c0_53 = arith.constant 0 : index
    %c0_54 = arith.constant 0 : index
    %83 = vector.load %arg7[%c6_52, %c0_53, %c0_54] : memref<9x4x4xbf16, #tpu.memory_space<vmem>>, vector<1x4x4xbf16>
    %84 = vector.shape_cast %83 : vector<1x4x4xbf16> to vector<4x4xbf16>
    %85 = arith.truncf %82 : vector<4x256xf32> to vector<4x256xbf16>
    %cst_55 = arith.constant dense<0.000000e+00> : vector<4x256xf32>
    %86 = tpu.matmul %84, %85, %cst_55 {dimension_numbers = #tpu.dot_dimension_numbers<[1], [0], [0], [1], [0, 0, 1, 1], [], []>} : vector<4x4xbf16>, vector<4x256xbf16>, vector<4x256xf32> -> vector<4x256xf32>
    %87 = arith.addf %77, %86 : vector<4x256xf32>
    %c240_i32 = arith.constant 240 : i32
    %88 = tpu.dynamic_rotate %17 by %c240_i32 dim 1 : vector<4x256xf32>, i32 -> vector<4x256xf32>
    %c7 = arith.constant 7 : index
    %c0_56 = arith.constant 0 : index
    %c0_57 = arith.constant 0 : index
    %89 = vector.load %arg2[%c7, %c0_56, %c0_57] : memref<9x1x256xf32, #tpu.memory_space<vmem>>, vector<1x1x256xf32>
    %90 = vector.shape_cast %89 : vector<1x1x256xf32> to vector<1x256xf32>
    %91 = vector.broadcast %90 : vector<1x256xf32> to vector<4x256xf32>
    %92 = arith.mulf %88, %91 : vector<4x256xf32>
    %c7_58 = arith.constant 7 : index
    %c0_59 = arith.constant 0 : index
    %c0_60 = arith.constant 0 : index
    %93 = vector.load %arg7[%c7_58, %c0_59, %c0_60] : memref<9x4x4xbf16, #tpu.memory_space<vmem>>, vector<1x4x4xbf16>
    %94 = vector.shape_cast %93 : vector<1x4x4xbf16> to vector<4x4xbf16>
    %95 = arith.truncf %92 : vector<4x256xf32> to vector<4x256xbf16>
    %cst_61 = arith.constant dense<0.000000e+00> : vector<4x256xf32>
    %96 = tpu.matmul %94, %95, %cst_61 {dimension_numbers = #tpu.dot_dimension_numbers<[1], [0], [0], [1], [0, 0, 1, 1], [], []>} : vector<4x4xbf16>, vector<4x256xbf16>, vector<4x256xf32> -> vector<4x256xf32>
    %97 = arith.addf %87, %96 : vector<4x256xf32>
    %c239_i32 = arith.constant 239 : i32
    %98 = tpu.dynamic_rotate %17 by %c239_i32 dim 1 : vector<4x256xf32>, i32 -> vector<4x256xf32>
    %c8 = arith.constant 8 : index
    %c0_62 = arith.constant 0 : index
    %c0_63 = arith.constant 0 : index
    %99 = vector.load %arg2[%c8, %c0_62, %c0_63] : memref<9x1x256xf32, #tpu.memory_space<vmem>>, vector<1x1x256xf32>
    %100 = vector.shape_cast %99 : vector<1x1x256xf32> to vector<1x256xf32>
    %101 = vector.broadcast %100 : vector<1x256xf32> to vector<4x256xf32>
    %102 = arith.mulf %98, %101 : vector<4x256xf32>
    %c8_64 = arith.constant 8 : index
    %c0_65 = arith.constant 0 : index
    %c0_66 = arith.constant 0 : index
    %103 = vector.load %arg7[%c8_64, %c0_65, %c0_66] : memref<9x4x4xbf16, #tpu.memory_space<vmem>>, vector<1x4x4xbf16>
    %104 = vector.shape_cast %103 : vector<1x4x4xbf16> to vector<4x4xbf16>
    %105 = arith.truncf %102 : vector<4x256xf32> to vector<4x256xbf16>
    %cst_67 = arith.constant dense<0.000000e+00> : vector<4x256xf32>
    %106 = tpu.matmul %104, %105, %cst_67 {dimension_numbers = #tpu.dot_dimension_numbers<[1], [0], [0], [1], [0, 0, 1, 1], [], []>} : vector<4x4xbf16>, vector<4x256xbf16>, vector<4x256xf32> -> vector<4x256xf32>
    %107 = arith.addf %97, %106 : vector<4x256xf32>
    %c0_68 = arith.constant 0 : index
    %c0_69 = arith.constant 0 : index
    %108 = vector.load %arg8[%c0_68, %c0_69] : memref<4x1xf32, #tpu.memory_space<vmem>>, vector<4x1xf32>
    %109 = vector.broadcast %108 : vector<4x1xf32> to vector<4x256xf32>
    %110 = arith.addf %107, %109 : vector<4x256xf32>
    %cst_70 = arith.constant 0.000000e+00 : f32
    %111 = vector.broadcast %cst_70 : f32 to vector<4x256xf32>
    %112 = arith.maximumf %110, %111 : vector<4x256xf32>
    %c0_71 = arith.constant 0 : index
    %c0_72 = arith.constant 0 : index
    %113 = vector.load %arg9[%c0_71, %c0_72] : memref<8x4xbf16, #tpu.memory_space<vmem>>, vector<8x4xbf16>
    %114 = arith.truncf %112 : vector<4x256xf32> to vector<4x256xbf16>
    %cst_73 = arith.constant dense<0.000000e+00> : vector<8x256xf32>
    %115 = tpu.matmul %113, %114, %cst_73 {dimension_numbers = #tpu.dot_dimension_numbers<[1], [0], [0], [1], [0, 0, 1, 1], [], []>} : vector<8x4xbf16>, vector<4x256xbf16>, vector<8x256xf32> -> vector<8x256xf32>
    %c0_74 = arith.constant 0 : index
    %c0_75 = arith.constant 0 : index
    %116 = vector.load %arg10[%c0_74, %c0_75] : memref<8x1xf32, #tpu.memory_space<vmem>>, vector<8x1xf32>
    %117 = vector.broadcast %116 : vector<8x1xf32> to vector<8x256xf32>
    %118 = arith.addf %115, %117 : vector<8x256xf32>
    %119 = arith.addf %118, %1 : vector<8x256xf32>
    %c0_76 = arith.constant 0 : index
    %c0_77 = arith.constant 0 : index
    %c0_78 = arith.constant 0 : index
    %120 = vector.load %arg11[%c0_76, %c0_77, %c0_78] : memref<1x8x256xf32, #tpu.memory_space<vmem>>, vector<1x8x256xf32>
    %121 = vector.shape_cast %120 : vector<1x8x256xf32> to vector<8x256xf32>
    %122 = vector.shape_cast %119 : vector<8x256xf32> to vector<1x8x256xf32>
    tpu.vector_store %arg11[%c0_76, %c0_77, %c0_78], %122 {strides = array<i32>} : memref<1x8x256xf32, #tpu.memory_space<vmem>>, vector<1x8x256xf32>,
    return
  }
  func.func @transform_0(%arg0: i32) -> (i32, i32, i32) {
    %c0_i32 = arith.constant 0 : i32
    %c0_i32_0 = arith.constant 0 : i32
    %c0_i32_1 = arith.constant 0 : i32
    return %arg0, %c0_i32, %c0_i32_0 : i32, i32, i32
  }
  func.func @transform_1(%arg0: i32) -> (i32, i32, i32) {
    %c0_i32 = arith.constant 0 : i32
    %c0_i32_0 = arith.constant 0 : i32
    %c0_i32_1 = arith.constant 0 : i32
    %c0_i32_2 = arith.constant 0 : i32
    return %c0_i32, %c0_i32_0, %c0_i32_1 : i32, i32, i32
  }
  func.func @transform_2(%arg0: i32) -> (i32, i32) {
    %c0_i32 = arith.constant 0 : i32
    %c0_i32_0 = arith.constant 0 : i32
    %c0_i32_1 = arith.constant 0 : i32
    return %c0_i32, %c0_i32_0 : i32, i32
  }
  func.func @transform_3(%arg0: i32) -> (i32, i32) {
    %c0_i32 = arith.constant 0 : i32
    %c0_i32_0 = arith.constant 0 : i32
    %c0_i32_1 = arith.constant 0 : i32
    return %c0_i32, %c0_i32_0 : i32, i32
  }
  func.func @transform_4(%arg0: i32) -> (i32, i32) {
    %c0_i32 = arith.constant 0 : i32
    %c0_i32_0 = arith.constant 0 : i32
    %c0_i32_1 = arith.constant 0 : i32
    return %c0_i32, %c0_i32_0 : i32, i32
  }
  func.func @transform_5(%arg0: i32) -> (i32, i32) {
    %c0_i32 = arith.constant 0 : i32
    %c0_i32_0 = arith.constant 0 : i32
    %c0_i32_1 = arith.constant 0 : i32
    return %c0_i32, %c0_i32_0 : i32, i32
  }
  func.func @transform_6(%arg0: i32) -> (i32, i32, i32) {
    %c0_i32 = arith.constant 0 : i32
    %c0_i32_0 = arith.constant 0 : i32
    %c0_i32_1 = arith.constant 0 : i32
    %c0_i32_2 = arith.constant 0 : i32
    return %c0_i32, %c0_i32_0, %c0_i32_1 : i32, i32, i32
  }
  func.func @transform_7(%arg0: i32) -> (i32, i32) {
    %c0_i32 = arith.constant 0 : i32
    %c0_i32_0 = arith.constant 0 : i32
    %c0_i32_1 = arith.constant 0 : i32
    return %c0_i32, %c0_i32_0 : i32, i32
  }
  func.func @transform_8(%arg0: i32) -> (i32, i32) {
    %c0_i32 = arith.constant 0 : i32
    %c0_i32_0 = arith.constant 0 : i32
    %c0_i32_1 = arith.constant 0 : i32
    return %c0_i32, %c0_i32_0 : i32, i32
  }
  func.func @transform_9(%arg0: i32) -> (i32, i32) {
    %c0_i32 = arith.constant 0 : i32
    %c0_i32_0 = arith.constant 0 : i32
    %c0_i32_1 = arith.constant 0 : i32
    return %c0_i32, %c0_i32_0 : i32, i32
  }
  func.func @transform_10(%arg0: i32) -> (i32, i32, i32) {
    %c0_i32 = arith.constant 0 : i32
    %c0_i32_0 = arith.constant 0 : i32
    %c0_i32_1 = arith.constant 0 : i32
    return %arg0, %c0_i32, %c0_i32_0 : i32, i32, i32
  }
}

</mosaic_0001>

<llo_original>
// kernel: bottleneck2d_forward.1
$region0: #{bottleneck2d_forward.1}
  #allocation0 [shape = 'u32[]', space=smem, size = 0x4, offset = 0x4, fixed_abs, tag = 'smem constant byte address 0x4 - core index']
  #allocation1 [shape = 'u32[144,128]{1,0:T(1,128)}', space=vmem, size = 0x12000, scoped, tag = 'internal scratch']
  %s0 = inlined_call_operand.vmem [shape: f32[2,8,256], index: 0, kind: input, shape index: {}]
  %s1 = inlined_call_operand.vmem [shape: f32[9,1,256], index: 1, kind: input, shape index: {}]
  %s2 = inlined_call_operand.vmem [shape: f32[8,1], index: 2, kind: input, shape index: {}]
  %s3 = inlined_call_operand.vmem [shape: f32[8,1], index: 3, kind: input, shape index: {}]
  %s4 = inlined_call_operand.vmem [shape: bf16[4,8], index: 4, kind: input, shape index: {}]
  %s5 = inlined_call_operand.vmem [shape: f32[4,1], index: 5, kind: input, shape index: {}]
  %s6 = inlined_call_operand.vmem [shape: bf16[9,4,4], index: 6, kind: input, shape index: {}]
  %s7 = inlined_call_operand.vmem [shape: f32[4,1], index: 7, kind: input, shape index: {}]
  %s8 = inlined_call_operand.vmem [shape: bf16[8,4], index: 8, kind: input, shape index: {}]
  %s9 = inlined_call_operand.vmem [shape: f32[8,1], index: 9, kind: input, shape index: {}]
  %s10 = inlined_call_operand.vmem [shape: f32[2,8,256], index: 10, kind: output, shape index: {}]
  %s11 = sld [smem:[#allocation0]]
  $region73: #{bottleneck2d_forward.1} parent=0
    _
  %s13 = ssub.s32 1, %s11
  %s14 = scalar_select 0, %s13, %s11
  loop: start=0, step=1, limit=4
  $region2: #{bottleneck2d_forward.1} parent=0 // loop_pre_header
    _
  $region3: #{bottleneck2d_forward.1} parent=0 // loop_header
    %s16 = sphi 0, %s20
    %p17 = scmp.ge.s32.totalorder %s16, 4
    %s26 = sphi 0, %s28
    %s29 = sphi 0, %s26
    %s30 = sphi 0, %s29
    %s46 = sphi 0, %s30
    %s50 = sphi 0, %s50
    %s52 = sphi 0, %s50
    %s53 = sphi 0, %s52
    %s67 = sphi 0, %s53
    %s71 = sphi 0, %s71
    %s73 = sphi 0, %s71
    %s74 = sphi 0, %s73
    %s88 = sphi 0, %s74
    %s92 = sphi 0, %s92
    %s94 = sphi 0, %s92
    %s95 = sphi 0, %s94
    %s109 = sphi 0, %s95
    %s113 = sphi 0, %s113
    %s115 = sphi 0, %s113
    %s116 = sphi 0, %s115
    %s130 = sphi 0, %s116
    %s134 = sphi 0, %s134
    %s136 = sphi 0, %s134
    %s137 = sphi 0, %s136
    %s151 = sphi 0, %s137
    %s155 = sphi 0, %s155
    %s157 = sphi 0, %s155
    %s158 = sphi 0, %s157
    %s172 = sphi 0, %s158
    %s176 = sphi 0, %s176
    %s178 = sphi 0, %s176
    %s179 = sphi 0, %s178
    %s193 = sphi 0, %s179
    %s197 = sphi 0, %s197
    %s199 = sphi 0, %s197
    %s200 = sphi 0, %s199
    %s214 = sphi 0, %s200
    %s218 = sphi 0, %s218
    %s220 = sphi 0, %s218
    %s221 = sphi 0, %s220
    %s235 = sphi 0, %s221
    %s241 = sphi 0, %s243
    %s244 = sphi 0, %s241
    %s245 = sphi 0, %s244
    %s261 = sphi 0, %s245
  $region4: #{bottleneck2d_forward.1} parent=0 // loop_header_branch
    %19 = sbr.rel (%p17) target = $region8
  $region5: #{bottleneck2d_forward.1} parent=0 // loop_body
    %s21 = ssub.s32 %s16, 1
    %s22 = ssub.s32 %s16, 2
    %s23 = sadd.s32 %s16, 1
    %s24 = ssub.s32 %s16, %s23
    %p25 = scmp.eq.s32.totalorder %s24, 0
    %s27 = sadd.s32 %s26, 1
    %s28 = scalar_select %p25, %s26, %s27
    %p31 = pneg %p25
    %p32 = scmp.eq.s32.totalorder %s16, 1
    %p33 = por %p31, %p32
    %p34 = scmp.ne.s32.totalorder %s26, %s29
    %p35 = scmp.eq.s32.totalorder %s16, 0
    %p36 = por %p34, %p35
    %p37 = scmp.ne.s32.totalorder %s26, %s29
    %p38 = scmp.eq.s32.totalorder %s21, 1
    %p39 = por %p37, %p38
    %p40 = scmp.ne.s32.totalorder %s29, %s30
    %p41 = scmp.eq.s32.totalorder %s21, 0
    %p42 = por %p40, %p41
    %p43 = scmp.ne.s32.totalorder %s29, %s30
    %p44 = scmp.eq.s32.totalorder %s22, 1
    %p45 = por %p43, %p44
    %p47 = scmp.ne.s32.totalorder %s30, %s46
    %p48 = scmp.eq.s32.totalorder %s22, 0
    %p49 = por %p47, %p48
    %s51 = sadd.s32 %s50, 1
    %p54 = scmp.eq.s32.totalorder %s16, 1
    %p55 = scmp.ne.s32.totalorder %s50, %s52
    %p56 = scmp.eq.s32.totalorder %s16, 0
    %p57 = por %p55, %p56
    %p58 = scmp.ne.s32.totalorder %s50, %s52
    %p59 = scmp.eq.s32.totalorder %s21, 1
    %p60 = por %p58, %p59
    %p61 = scmp.ne.s32.totalorder %s52, %s53
    %p62 = scmp.eq.s32.totalorder %s21, 0
    %p63 = por %p61, %p62
    %p64 = scmp.ne.s32.totalorder %s52, %s53
    %p65 = scmp.eq.s32.totalorder %s22, 1
    %p66 = por %p64, %p65
    %p68 = scmp.ne.s32.totalorder %s53, %s67
    %p69 = scmp.eq.s32.totalorder %s22, 0
    %p70 = por %p68, %p69
    %s72 = sadd.s32 %s71, 1
    %p75 = scmp.eq.s32.totalorder %s16, 1
    %p76 = scmp.ne.s32.totalorder %s71, %s73
    %p77 = scmp.eq.s32.totalorder %s16, 0
    %p78 = por %p76, %p77
    %p79 = scmp.ne.s32.totalorder %s71, %s73
    %p80 = scmp.eq.s32.totalorder %s21, 1
    %p81 = por %p79, %p80
    %p82 = scmp.ne.s32.totalorder %s73, %s74
    %p83 = scmp.eq.s32.totalorder %s21, 0
    %p84 = por %p82, %p83
    %p85 = scmp.ne.s32.totalorder %s73, %s74
    %p86 = scmp.eq.s32.totalorder %s22, 1
    %p87 = por %p85, %p86
    %p89 = scmp.ne.s32.totalorder %s74, %s88
    %p90 = scmp.eq.s32.totalorder %s22, 0
    %p91 = por %p89, %p90
    %s93 = sadd.s32 %s92, 1
    %p96 = scmp.eq.s32.totalorder %s16, 1
    %p97 = scmp.ne.s32.totalorder %s92, %s94
    %p98 = scmp.eq.s32.totalorder %s16, 0
    %p99 = por %p97, %p98
    %p100 = scmp.ne.s32.totalorder %s92, %s94
    %p101 = scmp.eq.s32.totalorder %s21, 1
    %p102 = por %p100, %p101
    %p103 = scmp.ne.s32.totalorder %s94, %s95
    %p104 = scmp.eq.s32.totalorder %s21, 0
    %p105 = por %p103, %p104
    %p106 = scmp.ne.s32.totalorder %s94, %s95
    %p107 = scmp.eq.s32.totalorder %s22, 1
    %p108 = por %p106, %p107
    %p110 = scmp.ne.s32.totalorder %s95, %s109
    %p111 = scmp.eq.s32.totalorder %s22, 0
    %p112 = por %p110, %p111
    %s114 = sadd.s32 %s113, 1
    %p117 = scmp.eq.s32.totalorder %s16, 1
    %p118 = scmp.ne.s32.totalorder %s113, %s115
    %p119 = scmp.eq.s32.totalorder %s16, 0
    %p120 = por %p118, %p119
    %p121 = scmp.ne.s32.totalorder %s113, %s115
    %p122 = scmp.eq.s32.totalorder %s21, 1
    %p123 = por %p121, %p122
    %p124 = scmp.ne.s32.totalorder %s115, %s116
    %p125 = scmp.eq.s32.totalorder %s21, 0
    %p126 = por %p124, %p125
    %p127 = scmp.ne.s32.totalorder %s115, %s116
    %p128 = scmp.eq.s32.totalorder %s22, 1
    %p129 = por %p127, %p128
    %p131 = scmp.ne.s32.totalorder %s116, %s130
    %p132 = scmp.eq.s32.totalorder %s22, 0
    %p133 = por %p131, %p132
    %s135 = sadd.s32 %s134, 1
    %p138 = scmp.eq.s32.totalorder %s16, 1
    %p139 = scmp.ne.s32.totalorder %s134, %s136
    %p140 = scmp.eq.s32.totalorder %s16, 0
    %p141 = por %p139, %p140
    %p142 = scmp.ne.s32.totalorder %s134, %s136
    %p143 = scmp.eq.s32.totalorder %s21, 1
    %p144 = por %p142, %p143
    %p145 = scmp.ne.s32.totalorder %s136, %s137
    %p146 = scmp.eq.s32.totalorder %s21, 0
    %p147 = por %p145, %p146
    %p148 = scmp.ne.s32.totalorder %s136, %s137
    %p149 = scmp.eq.s32.totalorder %s22, 1
    %p150 = por %p148, %p149
    %p152 = scmp.ne.s32.totalorder %s137, %s151
    %p153 = scmp.eq.s32.totalorder %s22, 0
    %p154 = por %p152, %p153
    %s156 = sadd.s32 %s155, 1
    %p159 = scmp.eq.s32.totalorder %s16, 1
    %p160 = scmp.ne.s32.totalorder %s155, %s157
    %p161 = scmp.eq.s32.totalorder %s16, 0
    %p162 = por %p160, %p161
    %p163 = scmp.ne.s32.totalorder %s155, %s157
    %p164 = scmp.eq.s32.totalorder %s21, 1
    %p165 = por %p163, %p164
    %p166 = scmp.ne.s32.totalorder %s157, %s158
    %p167 = scmp.eq.s32.totalorder %s21, 0
    %p168 = por %p166, %p167
    %p169 = scmp.ne.s32.totalorder %s157, %s158
    %p170 = scmp.eq.s32.totalorder %s22, 1
    %p171 = por %p169, %p170
    %p173 = scmp.ne.s32.totalorder %s158, %s172
    %p174 = scmp.eq.s32.totalorder %s22, 0
    %p175 = por %p173, %p174
    %s177 = sadd.s32 %s176, 1
    %p180 = scmp.eq.s32.totalorder %s16, 1
    %p181 = scmp.ne.s32.totalorder %s176, %s178
    %p182 = scmp.eq.s32.totalorder %s16, 0
    %p183 = por %p181, %p182
    %p184 = scmp.ne.s32.totalorder %s176, %s178
    %p185 = scmp.eq.s32.totalorder %s21, 1
    %p186 = por %p184, %p185
    %p187 = scmp.ne.s32.totalorder %s178, %s179
    %p188 = scmp.eq.s32.totalorder %s21, 0
    %p189 = por %p187, %p188
    %p190 = scmp.ne.s32.totalorder %s178, %s179
    %p191 = scmp.eq.s32.totalorder %s22, 1
    %p192 = por %p190, %p191
    %p194 = scmp.ne.s32.totalorder %s179, %s193
    %p195 = scmp.eq.s32.totalorder %s22, 0
    %p196 = por %p194, %p195
    %s198 = sadd.s32 %s197, 1
    %p201 = scmp.eq.s32.totalorder %s16, 1
    %p202 = scmp.ne.s32.totalorder %s197, %s199
    %p203 = scmp.eq.s32.totalorder %s16, 0
    %p204 = por %p202, %p203
    %p205 = scmp.ne.s32.totalorder %s197, %s199
    %p206 = scmp.eq.s32.totalorder %s21, 1
    %p207 = por %p205, %p206
    %p208 = scmp.ne.s32.totalorder %s199, %s200
    %p209 = scmp.eq.s32.totalorder %s21, 0
    %p210 = por %p208, %p209
    %p211 = scmp.ne.s32.totalorder %s199, %s200
    %p212 = scmp.eq.s32.totalorder %s22, 1
    %p213 = por %p211, %p212
    %p215 = scmp.ne.s32.totalorder %s200, %s214
    %p216 = scmp.eq.s32.totalorder %s22, 0
    %p217 = por %p215, %p216
    %s219 = sadd.s32 %s218, 1
    %p222 = scmp.eq.s32.totalorder %s16, 1
    %p223 = scmp.ne.s32.totalorder %s218, %s220
    %p224 = scmp.eq.s32.totalorder %s16, 0
    %p225 = por %p223, %p224
    %p226 = scmp.ne.s32.totalorder %s218, %s220
    %p227 = scmp.eq.s32.totalorder %s21, 1
    %p228 = por %p226, %p227
    %p229 = scmp.ne.s32.totalorder %s220, %s221
    %p230 = scmp.eq.s32.totalorder %s21, 0
    %p231 = por %p229, %p230
    %p232 = scmp.ne.s32.totalorder %s220, %s221
    %p233 = scmp.eq.s32.totalorder %s22, 1
    %p234 = por %p232, %p233
    %p236 = scmp.ne.s32.totalorder %s221, %s235
    %p237 = scmp.eq.s32.totalorder %s22, 0
    %p238 = por %p236, %p237
    %s239 = ssub.s32 %s16, %s23
    %p240 = scmp.eq.s32.totalorder %s239, 0
    %s242 = sadd.s32 %s241, 1
    %s243 = scalar_select %p240, %s241, %s242
    %p246 = pneg %p240
    %p247 = scmp.eq.s32.totalorder %s16, 1
    %p248 = por %p246, %p247
    %p249 = scmp.ne.s32.totalorder %s241, %s244
    %p250 = scmp.eq.s32.totalorder %s16, 0
    %p251 = por %p249, %p250
    %p252 = scmp.ne.s32.totalorder %s241, %s244
    %p253 = scmp.eq.s32.totalorder %s21, 1
    %p254 = por %p252, %p253
    %p255 = scmp.ne.s32.totalorder %s244, %s245
    %p256 = scmp.eq.s32.totalorder %s21, 0
    %p257 = por %p255, %p256
    %p258 = scmp.ne.s32.totalorder %s244, %s245
    %p259 = scmp.eq.s32.totalorder %s22, 1
    %p260 = por %p258, %p259
    %p262 = scmp.ne.s32.totalorder %s245, %s261
    %p263 = scmp.eq.s32.totalorder %s22, 0
    %p264 = por %p262, %p263
    %p265 = scmp.le.s32.totalorder 1, %s16
    %p266 = scmp.lt.s32.totalorder %s16, 3
    %p267 = pnand %p265, %p266
    %p268 = pneg %p267
    // Predicated region
    $region9: #{bottleneck2d_forward.1} parent=5 // pred_check
      _
    $region10: #{bottleneck2d_forward.1} parent=5 // pred_check_branch
      %270 = sbr.rel (%p267) target = $region12
    $region11: #{bottleneck2d_forward.1} parent=5 // pred_region
      %s271 = ssub.s32 %s16, 1
      // Predicated region
      $region13: #{bottleneck2d_forward.1} parent=11 // pred_check
        %p272 = pneg %p63
      $region14: #{bottleneck2d_forward.1} parent=11 // pred_check_branch
        %274 = sbr.rel (%p272) target = $region16
      $region15: #{bottleneck2d_forward.1} parent=11 // pred_region
        _
      $region16: #{bottleneck2d_forward.1} parent=11 // pred_fallthru
        _
      // Predicated region
      $region17: #{bottleneck2d_forward.1} parent=11 // pred_check
        %p275 = pneg %p84
      $region18: #{bottleneck2d_forward.1} parent=11 // pred_check_branch
        %277 = sbr.rel (%p275) target = $region20
      $region19: #{bottleneck2d_forward.1} parent=11 // pred_region
        _
      $region20: #{bottleneck2d_forward.1} parent=11 // pred_fallthru
        _
      // Predicated region
      $region21: #{bottleneck2d_forward.1} parent=11 // pred_check
        %p278 = pneg %p105
      $region22: #{bottleneck2d_forward.1} parent=11 // pred_check_branch
        %280 = sbr.rel (%p278) target = $region24
      $region23: #{bottleneck2d_forward.1} parent=11 // pred_region
        _
      $region24: #{bottleneck2d_forward.1} parent=11 // pred_fallthru
        _
      // Predicated region
      $region25: #{bottleneck2d_forward.1} parent=11 // pred_check
        %p281 = pneg %p126
      $region26: #{bottleneck2d_forward.1} parent=11 // pred_check_branch
        %283 = sbr.rel (%p281) target = $region28
      $region27: #{bottleneck2d_forward.1} parent=11 // pred_region
        _
      $region28: #{bottleneck2d_forward.1} parent=11 // pred_fallthru
        _
      // Predicated region
      $region29: #{bottleneck2d_forward.1} parent=11 // pred_check
        %p284 = pneg %p147
      $region30: #{bottleneck2d_forward.1} parent=11 // pred_check_branch
        %286 = sbr.rel (%p284) target = $region32
      $region31: #{bottleneck2d_forward.1} parent=11 // pred_region
        _
      $region32: #{bottleneck2d_forward.1} parent=11 // pred_fallthru
        _
      // Predicated region
      $region33: #{bottleneck2d_forward.1} parent=11 // pred_check
        %p287 = pneg %p168
      $region34: #{bottleneck2d_forward.1} parent=11 // pred_check_branch
        %289 = sbr.rel (%p287) target = $region36
      $region35: #{bottleneck2d_forward.1} parent=11 // pred_region
        _
      $region36: #{bottleneck2d_forward.1} parent=11 // pred_fallthru
        _
      // Predicated region
      $region37: #{bottleneck2d_forward.1} parent=11 // pred_check
        %p290 = pneg %p189
      $region38: #{bottleneck2d_forward.1} parent=11 // pred_check_branch
        %292 = sbr.rel (%p290) target = $region40
      $region39: #{bottleneck2d_forward.1} parent=11 // pred_region
        _
      $region40: #{bottleneck2d_forward.1} parent=11 // pred_fallthru
        _
      // Predicated region
      $region41: #{bottleneck2d_forward.1} parent=11 // pred_check
        %p293 = pneg %p210
      $region42: #{bottleneck2d_forward.1} parent=11 // pred_check_branch
        %295 = sbr.rel (%p293) target = $region44
      $region43: #{bottleneck2d_forward.1} parent=11 // pred_region
        _
      $region44: #{bottleneck2d_forward.1} parent=11 // pred_fallthru
        _
      // Predicated region
      $region45: #{bottleneck2d_forward.1} parent=11 // pred_check
        %p296 = pneg %p231
      $region46: #{bottleneck2d_forward.1} parent=11 // pred_check_branch
        %298 = sbr.rel (%p296) target = $region48
      $region47: #{bottleneck2d_forward.1} parent=11 // pred_region
        _
      $region48: #{bottleneck2d_forward.1} parent=11 // pred_fallthru
        _
    $region12: #{bottleneck2d_forward.1} parent=5 // pred_fallthru
      _
    %p299 = scmp.lt.s32.totalorder %s16, 2
    // Predicated region
    $region49: #{bottleneck2d_forward.1} parent=5 // pred_check
      %p300 = pneg %p299
    $region50: #{bottleneck2d_forward.1} parent=5 // pred_check_branch
      %302 = sbr.rel (%p300) target = $region52
    $region51: #{bottleneck2d_forward.1} parent=5 // pred_region
      // Predicated region
      $region53: #{bottleneck2d_forward.1} parent=51 // pred_check
        %p303 = pneg %p36
      $region54: #{bottleneck2d_forward.1} parent=51 // pred_check_branch
        %305 = sbr.rel (%p303) target = $region56
      $region55: #{bottleneck2d_forward.1} parent=51 // pred_region
        %p306 = scmp.lt.s32.totalorder %s16, 1
        %s307 = scalar_select %p306, %s16, 1
        %s308 = smul.addr %s307, 2
        %s309 = smul.addr %s308, 8
        %s310 = scalar_lea.vmem %s0, %s309
      $region56: #{bottleneck2d_forward.1} parent=51 // pred_fallthru
        _
    $region52: #{bottleneck2d_forward.1} parent=5 // pred_fallthru
      _
    %p311 = scmp.le.s32.totalorder 1, %s16
    %p312 = scmp.lt.s32.totalorder %s16, 3
    %p313 = pnand %p311, %p312
    %p314 = pneg %p313
    // Predicated region
    $region57: #{bottleneck2d_forward.1} parent=5 // pred_check
      _
    $region58: #{bottleneck2d_forward.1} parent=5 // pred_check_branch
      %316 = sbr.rel (%p313) target = $region60
    $region59: #{bottleneck2d_forward.1} parent=5 // pred_region
      %s317 = ssub.s32 %s16, 1
      %p318 = scmp.lt.s32.totalorder %s21, 1
      %s319 = scalar_select %p318, %s21, 1
      %s320 = smul.addr %s319, 2
      %s321 = smul.addr %s320, 8
      %s322 = scalar_lea.vmem %s0, %s321
      %p323 = pneg %p42
      %p324 = pneg %p39
      %p325 = pneg %p63
      %p326 = pneg %p60
      %p327 = pneg %p84
      %p328 = pneg %p81
      %p329 = pneg %p105
      %p330 = pneg %p102
      %p331 = pneg %p126
      %p332 = pneg %p123
      %p333 = pneg %p147
      %p334 = pneg %p144
      %p335 = pneg %p168
      %p336 = pneg %p165
      %p337 = pneg %p189
      %p338 = pneg %p186
      %p339 = pneg %p210
      %p340 = pneg %p207
      %p341 = pneg %p231
      %p342 = pneg %p228
      %p343 = pneg %p257
      %p344 = pneg %p254
      %p345 = scmp.lt.s32.totalorder %s21, 1
      %s346 = scalar_select %p345, %s21, 1
      %s347 = smul.addr %s346, 2
      %s348 = smul.addr %s347, 8
      %s349 = scalar_lea.vmem %s10, %s348
      %p350 = scmp.lt.s32.totalorder %s21, 1
      %s351 = scalar_select %p350, %s21, 1
      %s352 = smul.addr %s351, 2
      %s353 = smul.addr %s352, 8
      %s354 = scalar_lea.vmem %s0, %s353
      %p355 = scmp.lt.s32.totalorder %s21, 1
      %s356 = scalar_select %p355, %s21, 1
      %s357 = smul.addr %s356, 2
      %s358 = smul.addr %s357, 8
      %s359 = scalar_lea.vmem %s10, %s358
      %v361 = vld [vmem:[%s354] sm:$0xff]
      %v362 = vld [vmem:[%s354 + $0x8] sm:$0xff]
      %v363 = vld [vmem:[%s2] sm:$0xff]
      %365 = vset.pattern.permute.xlu0 0
      %366 = vperm.xlu0 %365, %v363
      %v367 = vpop.permute.xlu0 %366
      %v369 = vmul.f32 %v361, %v367
      %v370 = vmul.f32 %v362, %v367
      %v371 = vld [vmem:[%s3] sm:$0xff]
      %373 = vset.pattern.permute.xlu0 0
      %374 = vperm.xlu0 %373, %v371
      %v375 = vpop.permute.xlu0 %374
      %v377 = vadd.f32 %v369, %v375
      %v378 = vadd.f32 %v370, %v375
      %v379 = vmax.f32 %v377, 0.0
      %v380 = vmax.f32 %v378, 0.0
      %v381 = vld [vmem:[%s4] sm:$0x3]
      %v382 = vpack.c.bf16 %v379, %v379
      %v383 = vpack.c.bf16 %v380, %v380
      %v384 = vld [vmem:[%s5] sm:$0xf]
      %386 = vset.pattern.permute.xlu0 0
      %387 = vperm.xlu0 %386, %v384
      %v388 = vpop.permute.xlu0 %387
      %vm390 = vcmask 64512
      %v392 = vsel %vm390, %v381, 0
      %vm394 = vcmask 1043456
      %v396 = vsel %vm394, %v382, 0
      %v399 = vsel %vm394, %v383, 0
      %401 = vmatprep.subr.bf16.mxu0 0
      %402 = vmatpush1.bf16.msra.mxu0 0
      %403 = vmatprep.subr.bf16.mxu0 0
      %404 = vmatpush1.bf16.msra.mxu0 0
      %405 = vmatprep.subr.bf16.mxu0 0
      %406 = vmatpush1.bf16.msra.mxu0 0
      %407 = vmatprep.subr.bf16.mxu0 0
      %408 = vmatpush1.bf16.msra.mxu0 0
      %409 = vmatprep.subr.bf16.mxu0 0
      %410 = vmatpush1.bf16.msra.mxu0 0
      %411 = vmatprep.subr.bf16.mxu0 0
      %412 = vmatpush1.bf16.msra.mxu0 0
      %413 = vmatprep.subr.bf16.mxu0 0
      %414 = vmatpush1.bf16.msra.mxu0 0
      %415 = vmatprep.subr.bf16.mxu0 %v399
      %416 = vmatpush1.bf16.msra.mxu0 %v396
      %417 = vmatprep.subr.bf16.mxu0 0
      %418 = vmatpush2.bf16.msra.mxu0 0
      %419 = vmatprep.subr.bf16.mxu0 0
      %420 = vmatpush2.bf16.msra.mxu0 0
      %421 = vmatprep.subr.bf16.mxu0 0
      %422 = vmatpush2.bf16.msra.mxu0 0
      %423 = vmatprep.subr.bf16.mxu0 0
      %424 = vmatpush2.bf16.msra.mxu0 0
      %425 = vmatprep.subr.bf16.mxu0 0
      %426 = vmatpush2.bf16.msra.mxu0 0
      %427 = vmatprep.subr.bf16.mxu0 0
      %428 = vmatpush2.bf16.msra.mxu0 0
      %429 = vmatprep.subr.bf16.mxu0 0
      %430 = vmatpush2.bf16.msra.mxu0 0
      %431 = vmatprep.subr.bf16.mxu0 0
      %432 = vmatpush2.bf16.msra.mxu0 0
      %433 = vmatprep.mubr.bf16.mxu0 0
      %434 = vmatmul.mubr.bf16.gmra.mxu0 %v392
      %v435 = vpop.f32.mrf.mxu0
      %v436 = vadd.f32 %v388, %v435
      %v437 = vpop.f32.mrf.mxu0
      %v438 = vadd.f32 %v388, %v437
      %v439 = vpop.f32.mrf.mxu0
      %v440 = vpop.f32.mrf.mxu0
      %441 = vdwg.mxu0
      %v442 = vmax.f32 %v436, 0.0
      %v443 = vmax.f32 %v438, 0.0
      %444 = vrot.lane.b32.xlu0 %v442, 17
      %v445 = vpop.permute.xlu0 %444
      %446 = vrot.lane.b32.xlu0 %v443, 17
      %v447 = vpop.permute.xlu0 %446
      %v448 = vlaneseq
      %v449 = vand.u32 %v448, 127
      %vm450 = vcmp.lt.s32.totalorder %v449, 17
      %v451 = vsel %vm450, %v445, %v447
      %v452 = vsel %vm450, %v447, %v445
      %v453 = vld [vmem:[%s1] sm:$0x3]
      %v455 = vlaneseq
      %v456 = vshrl.u32 %v455, 7
      %v457 = vsub.s32 0, %v456
      %v458 = vrot.slane %v453, %v457
      %v459 = vlaneseq
      %v460 = vshrl.u32 %v459, 7
      %v461 = vsub.s32 1, %v460
      %v462 = vrot.slane %v453, %v461
      %v465 = vmul.f32 %v452, %v458
      %v466 = vmul.f32 %v451, %v462
      %v467 = vld [vmem:[%s6] sm:$0x3]
      %v468 = vpack.c.bf16 %v465, %v465
      %v469 = vpack.c.bf16 %v466, %v466
      %470 = vrot.lane.b32.xlu0 %v442, 16
      %v471 = vpop.permute.xlu0 %470
      %472 = vrot.lane.b32.xlu0 %v443, 16
      %v473 = vpop.permute.xlu0 %472
      %vm474 = vcmp.lt.s32.totalorder %v449, 16
      %v475 = vsel %vm474, %v471, %v473
      %v476 = vsel %vm474, %v473, %v471
      %s477 = scalar_lea.vmem %s1, 2
      %v478 = vld [vmem:[%s477] sm:$0x3]
      %v480 = vlaneseq
      %v481 = vshrl.u32 %v480, 7
      %v482 = vsub.s32 0, %v481
      %v483 = vrot.slane %v478, %v482
      %v484 = vlaneseq
      %v485 = vshrl.u32 %v484, 7
      %v486 = vsub.s32 1, %v485
      %v487 = vrot.slane %v478, %v486
      %v490 = vmul.f32 %v476, %v483
      %v491 = vmul.f32 %v475, %v487
      %s492 = scalar_lea.vmem %s6, 2
      %v493 = vld [vmem:[%s492] sm:$0x3]
      %v494 = vpack.c.bf16 %v490, %v490
      %v495 = vpack.c.bf16 %v491, %v491
      %vm496 = vcmask 31744
      %v498 = vsel %vm496, %v493, 0
      %vm500 = vcmask 1041408
      %v502 = vsel %vm500, %v494, 0
      %v505 = vsel %vm500, %v495, 0
      %507 = vmatprep.subr.bf16.mxu0 0
      %508 = vmatpush1.bf16.msra.mxu0 0
      %509 = vmatprep.subr.bf16.mxu0 0
      %510 = vmatpush1.bf16.msra.mxu0 0
      %511 = vmatprep.subr.bf16.mxu0 0
      %512 = vmatpush1.bf16.msra.mxu0 0
      %513 = vmatprep.subr.bf16.mxu0 0
      %514 = vmatpush1.bf16.msra.mxu0 0
      %515 = vmatprep.subr.bf16.mxu0 0
      %516 = vmatpush1.bf16.msra.mxu0 0
      %517 = vmatprep.subr.bf16.mxu0 0
      %518 = vmatpush1.bf16.msra.mxu0 0
      %519 = vmatprep.subr.bf16.mxu0 0
      %520 = vmatpush1.bf16.msra.mxu0 0
      %521 = vmatprep.subr.bf16.mxu0 %v505
      %522 = vmatpush1.bf16.msra.mxu0 %v502
      %523 = vmatprep.subr.bf16.mxu0 0
      %524 = vmatpush2.bf16.msra.mxu0 0
      %525 = vmatprep.subr.bf16.mxu0 0
      %526 = vmatpush2.bf16.msra.mxu0 0
      %527 = vmatprep.subr.bf16.mxu0 0
      %528 = vmatpush2.bf16.msra.mxu0 0
      %529 = vmatprep.subr.bf16.mxu0 0
      %530 = vmatpush2.bf16.msra.mxu0 0
      %531 = vmatprep.subr.bf16.mxu0 0
      %532 = vmatpush2.bf16.msra.mxu0 0
      %533 = vmatprep.subr.bf16.mxu0 0
      %534 = vmatpush2.bf16.msra.mxu0 0
      %535 = vmatprep.subr.bf16.mxu0 0
      %536 = vmatpush2.bf16.msra.mxu0 0
      %537 = vmatprep.subr.bf16.mxu0 0
      %538 = vmatpush2.bf16.msra.mxu0 0
      %539 = vmatprep.mubr.bf16.mxu0 0
      %540 = vmatmul.mubr.bf16.gmra.mxu0 %v498
      %v541 = vpop.f32.mrf.mxu0
      %v542 = vadd.f32 0.0, %v541
      %v543 = vpop.f32.mrf.mxu0
      %v544 = vadd.f32 0.0, %v543
      %v545 = vpop.f32.mrf.mxu0
      %v546 = vpop.f32.mrf.mxu0
      %547 = vdwg.mxu0
      %v549 = vsel %vm496, %v467, 0
      %v552 = vsel %vm500, %v468, 0
      %v555 = vsel %vm500, %v469, 0
      %557 = vmatprep.subr.bf16.mxu0 0
      %558 = vmatpush1.bf16.msra.mxu0 0
      %559 = vmatprep.subr.bf16.mxu0 0
      %560 = vmatpush1.bf16.msra.mxu0 0
      %561 = vmatprep.subr.bf16.mxu0 0
      %562 = vmatpush1.bf16.msra.mxu0 0
      %563 = vmatprep.subr.bf16.mxu0 0
      %564 = vmatpush1.bf16.msra.mxu0 0
      %565 = vmatprep.subr.bf16.mxu0 0
      %566 = vmatpush1.bf16.msra.mxu0 0
      %567 = vmatprep.subr.bf16.mxu0 0
      %568 = vmatpush1.bf16.msra.mxu0 0
      %569 = vmatprep.subr.bf16.mxu0 0
      %570 = vmatpush1.bf16.msra.mxu0 0
      %571 = vmatprep.subr.bf16.mxu0 %v555
      %572 = vmatpush1.bf16.msra.mxu0 %v552
      %573 = vmatprep.subr.bf16.mxu0 0
      %574 = vmatpush2.bf16.msra.mxu0 0
      %575 = vmatprep.subr.bf16.mxu0 0
      %576 = vmatpush2.bf16.msra.mxu0 0
      %577 = vmatprep.subr.bf16.mxu0 0
      %578 = vmatpush2.bf16.msra.mxu0 0
      %579 = vmatprep.subr.bf16.mxu0 0
      %580 = vmatpush2.bf16.msra.mxu0 0
      %581 = vmatprep.subr.bf16.mxu0 0
      %582 = vmatpush2.bf16.msra.mxu0 0
      %583 = vmatprep.subr.bf16.mxu0 0
      %584 = vmatpush2.bf16.msra.mxu0 0
      %585 = vmatprep.subr.bf16.mxu0 0
      %586 = vmatpush2.bf16.msra.mxu0 0
      %587 = vmatprep.subr.bf16.mxu0 0
      %588 = vmatpush2.bf16.msra.mxu0 0
      %589 = vmatprep.mubr.bf16.mxu0 0
      %590 = vmatmul.mubr.bf16.gmra.mxu0 %v549
      %v591 = vpop.f32.mrf.mxu0
      %v592 = vadd.f32 %v542, %v591
      %v593 = vpop.f32.mrf.mxu0
      %v594 = vadd.f32 %v544, %v593
      %v595 = vpop.f32.mrf.mxu0
      %v596 = vpop.f32.mrf.mxu0
      %597 = vdwg.mxu0
      %598 = vrot.lane.b32.xlu0 %v442, 15
      %v599 = vpop.permute.xlu0 %598
      %600 = vrot.lane.b32.xlu0 %v443, 15
      %v601 = vpop.permute.xlu0 %600
      %vm602 = vcmp.lt.s32.totalorder %v449, 15
      %v603 = vsel %vm602, %v599, %v601
      %v604 = vsel %vm602, %v601, %v599
      %s605 = scalar_lea.vmem %s1, 4
      %v606 = vld [vmem:[%s605] sm:$0x3]
      %v608 = vlaneseq
      %v609 = vshrl.u32 %v608, 7
      %v610 = vsub.s32 0, %v609
      %v611 = vrot.slane %v606, %v610
      %v612 = vlaneseq
      %v613 = vshrl.u32 %v612, 7
      %v614 = vsub.s32 1, %v613
      %v615 = vrot.slane %v606, %v614
      %v618 = vmul.f32 %v604, %v611
      %v619 = vmul.f32 %v603, %v615
      %s620 = scalar_lea.vmem %s6, 4
      %v621 = vld [vmem:[%s620] sm:$0x3]
      %v622 = vpack.c.bf16 %v618, %v618
      %v623 = vpack.c.bf16 %v619, %v619
      %v625 = vsel %vm496, %v621, 0
      %v628 = vsel %vm500, %v622, 0
      %v631 = vsel %vm500, %v623, 0
      %633 = vmatprep.subr.bf16.mxu0 0
      %634 = vmatpush1.bf16.msra.mxu0 0
      %635 = vmatprep.subr.bf16.mxu0 0
      %636 = vmatpush1.bf16.msra.mxu0 0
      %637 = vmatprep.subr.bf16.mxu0 0
      %638 = vmatpush1.bf16.msra.mxu0 0
      %639 = vmatprep.subr.bf16.mxu0 0
      %640 = vmatpush1.bf16.msra.mxu0 0
      %641 = vmatprep.subr.bf16.mxu0 0
      %642 = vmatpush1.bf16.msra.mxu0 0
      %643 = vmatprep.subr.bf16.mxu0 0
      %644 = vmatpush1.bf16.msra.mxu0 0
      %645 = vmatprep.subr.bf16.mxu0 0
      %646 = vmatpush1.bf16.msra.mxu0 0
      %647 = vmatprep.subr.bf16.mxu0 %v631
      %648 = vmatpush1.bf16.msra.mxu0 %v628
      %649 = vmatprep.subr.bf16.mxu0 0
      %650 = vmatpush2.bf16.msra.mxu0 0
      %651 = vmatprep.subr.bf16.mxu0 0
      %652 = vmatpush2.bf16.msra.mxu0 0
      %653 = vmatprep.subr.bf16.mxu0 0
      %654 = vmatpush2.bf16.msra.mxu0 0
      %655 = vmatprep.subr.bf16.mxu0 0
      %656 = vmatpush2.bf16.msra.mxu0 0
      %657 = vmatprep.subr.bf16.mxu0 0
      %658 = vmatpush2.bf16.msra.mxu0 0
      %659 = vmatprep.subr.bf16.mxu0 0
      %660 = vmatpush2.bf16.msra.mxu0 0
      %661 = vmatprep.subr.bf16.mxu0 0
      %662 = vmatpush2.bf16.msra.mxu0 0
      %663 = vmatprep.subr.bf16.mxu0 0
      %664 = vmatpush2.bf16.msra.mxu0 0
      %665 = vmatprep.mubr.bf16.mxu0 0
      %666 = vmatmul.mubr.bf16.gmra.mxu0 %v625
      %v667 = vpop.f32.mrf.mxu0
      %v668 = vadd.f32 0.0, %v667
      %v669 = vpop.f32.mrf.mxu0
      %v670 = vadd.f32 0.0, %v669
      %v671 = vpop.f32.mrf.mxu0
      %v672 = vpop.f32.mrf.mxu0
      %673 = vdwg.mxu0
      %v674 = vadd.f32 %v592, %v668
      %v675 = vadd.f32 %v594, %v670
      %676 = vrot.lane.b32.xlu0 %v442, 1
      %v677 = vpop.permute.xlu0 %676
      %678 = vrot.lane.b32.xlu0 %v443, 1
      %v679 = vpop.permute.xlu0 %678
      %vm680 = vcmp.lt.s32.totalorder %v449, 1
      %v681 = vsel %vm680, %v677, %v679
      %v682 = vsel %vm680, %v679, %v677
      %s683 = scalar_lea.vmem %s1, 6
      %v684 = vld [vmem:[%s683] sm:$0x3]
      %v686 = vlaneseq
      %v687 = vshrl.u32 %v686, 7
      %v688 = vsub.s32 0, %v687
      %v689 = vrot.slane %v684, %v688
      %v690 = vlaneseq
      %v691 = vshrl.u32 %v690, 7
      %v692 = vsub.s32 1, %v691
      %v693 = vrot.slane %v684, %v692
      %v696 = vmul.f32 %v682, %v689
      %v697 = vmul.f32 %v681, %v693
      %s698 = scalar_lea.vmem %s6, 6
      %v699 = vld [vmem:[%s698] sm:$0x3]
      %v700 = vpack.c.bf16 %v696, %v696
      %v701 = vpack.c.bf16 %v697, %v697
      %v703 = vsel %vm496, %v699, 0
      %v706 = vsel %vm500, %v700, 0
      %v709 = vsel %vm500, %v701, 0
      %711 = vmatprep.subr.bf16.mxu0 0
      %712 = vmatpush1.bf16.msra.mxu0 0
      %713 = vmatprep.subr.bf16.mxu0 0
      %714 = vmatpush1.bf16.msra.mxu0 0
      %715 = vmatprep.subr.bf16.mxu0 0
      %716 = vmatpush1.bf16.msra.mxu0 0
      %717 = vmatprep.subr.bf16.mxu0 0
      %718 = vmatpush1.bf16.msra.mxu0 0
      %719 = vmatprep.subr.bf16.mxu0 0
      %720 = vmatpush1.bf16.msra.mxu0 0
      %721 = vmatprep.subr.bf16.mxu0 0
      %722 = vmatpush1.bf16.msra.mxu0 0
      %723 = vmatprep.subr.bf16.mxu0 0
      %724 = vmatpush1.bf16.msra.mxu0 0
      %725 = vmatprep.subr.bf16.mxu0 %v709
      %726 = vmatpush1.bf16.msra.mxu0 %v706
      %727 = vmatprep.subr.bf16.mxu0 0
      %728 = vmatpush2.bf16.msra.mxu0 0
      %729 = vmatprep.subr.bf16.mxu0 0
      %730 = vmatpush2.bf16.msra.mxu0 0
      %731 = vmatprep.subr.bf16.mxu0 0
      %732 = vmatpush2.bf16.msra.mxu0 0
      %733 = vmatprep.subr.bf16.mxu0 0
      %734 = vmatpush2.bf16.msra.mxu0 0
      %735 = vmatprep.subr.bf16.mxu0 0
      %736 = vmatpush2.bf16.msra.mxu0 0
      %737 = vmatprep.subr.bf16.mxu0 0
      %738 = vmatpush2.bf16.msra.mxu0 0
      %739 = vmatprep.subr.bf16.mxu0 0
      %740 = vmatpush2.bf16.msra.mxu0 0
      %741 = vmatprep.subr.bf16.mxu0 0
      %742 = vmatpush2.bf16.msra.mxu0 0
      %743 = vmatprep.mubr.bf16.mxu0 0
      %744 = vmatmul.mubr.bf16.gmra.mxu0 %v703
      %v745 = vpop.f32.mrf.mxu0
      %v746 = vadd.f32 0.0, %v745
      %v747 = vpop.f32.mrf.mxu0
      %v748 = vadd.f32 0.0, %v747
      %v749 = vpop.f32.mrf.mxu0
      %v750 = vpop.f32.mrf.mxu0
      %751 = vdwg.mxu0
      %v752 = vadd.f32 %v674, %v746
      %v753 = vadd.f32 %v675, %v748
      %s754 = scalar_lea.vmem %s1, 8
      %v755 = vld [vmem:[%s754] sm:$0x3]
      %v757 = vlaneseq
      %v758 = vshrl.u32 %v757, 7
      %v759 = vsub.s32 0, %v758
      %v760 = vrot.slane %v755, %v759
      %v761 = vlaneseq
      %v762 = vshrl.u32 %v761, 7
      %v763 = vsub.s32 1, %v762
      %v764 = vrot.slane %v755, %v763
      %v767 = vmul.f32 %v442, %v760
      %v768 = vmul.f32 %v443, %v764
      %s769 = scalar_lea.vmem %s6, 8
      %v770 = vld [vmem:[%s769] sm:$0x3]
      %v771 = vpack.c.bf16 %v767, %v767
      %v772 = vpack.c.bf16 %v768, %v768
      %v774 = vsel %vm496, %v770, 0
      %v777 = vsel %vm500, %v771, 0
      %v780 = vsel %vm500, %v772, 0
      %782 = vmatprep.subr.bf16.mxu0 0
      %783 = vmatpush1.bf16.msra.mxu0 0
      %784 = vmatprep.subr.bf16.mxu0 0
      %785 = vmatpush1.bf16.msra.mxu0 0
      %786 = vmatprep.subr.bf16.mxu0 0
      %787 = vmatpush1.bf16.msra.mxu0 0
      %788 = vmatprep.subr.bf16.mxu0 0
      %789 = vmatpush1.bf16.msra.mxu0 0
      %790 = vmatprep.subr.bf16.mxu0 0
      %791 = vmatpush1.bf16.msra.mxu0 0
      %792 = vmatprep.subr.bf16.mxu0 0
      %793 = vmatpush1.bf16.msra.mxu0 0
      %794 = vmatprep.subr.bf16.mxu0 0
      %795 = vmatpush1.bf16.msra.mxu0 0
      %796 = vmatprep.subr.bf16.mxu0 %v780
      %797 = vmatpush1.bf16.msra.mxu0 %v777
      %798 = vmatprep.subr.bf16.mxu0 0
      %799 = vmatpush2.bf16.msra.mxu0 0
      %800 = vmatprep.subr.bf16.mxu0 0
      %801 = vmatpush2.bf16.msra.mxu0 0
      %802 = vmatprep.subr.bf16.mxu0 0
      %803 = vmatpush2.bf16.msra.mxu0 0
      %804 = vmatprep.subr.bf16.mxu0 0
      %805 = vmatpush2.bf16.msra.mxu0 0
      %806 = vmatprep.subr.bf16.mxu0 0
      %807 = vmatpush2.bf16.msra.mxu0 0
      %808 = vmatprep.subr.bf16.mxu0 0
      %809 = vmatpush2.bf16.msra.mxu0 0
      %810 = vmatprep.subr.bf16.mxu0 0
      %811 = vmatpush2.bf16.msra.mxu0 0
      %812 = vmatprep.subr.bf16.mxu0 0
      %813 = vmatpush2.bf16.msra.mxu0 0
      %814 = vmatprep.mubr.bf16.mxu0 0
      %815 = vmatmul.mubr.bf16.gmra.mxu0 %v774
      %v816 = vpop.f32.mrf.mxu0
      %v817 = vadd.f32 0.0, %v816
      %v818 = vpop.f32.mrf.mxu0
      %v819 = vadd.f32 0.0, %v818
      %v820 = vpop.f32.mrf.mxu0
      %v821 = vpop.f32.mrf.mxu0
      %822 = vdwg.mxu0
      %v823 = vadd.f32 %v752, %v817
      %v824 = vadd.f32 %v753, %v819
      %825 = vrot.lane.b32.xlu0 %v442, 127
      %v826 = vpop.permute.xlu0 %825
      %827 = vrot.lane.b32.xlu0 %v443, 127
      %v828 = vpop.permute.xlu0 %827
      %vm829 = vcmp.lt.s32.totalorder %v449, 127
      %v830 = vsel %vm829, %v826, %v828
      %v831 = vsel %vm829, %v828, %v826
      %s832 = scalar_lea.vmem %s1, 10
      %v833 = vld [vmem:[%s832] sm:$0x3]
      %v835 = vlaneseq
      %v836 = vshrl.u32 %v835, 7
      %v837 = vsub.s32 0, %v836
      %v838 = vrot.slane %v833, %v837
      %v839 = vlaneseq
      %v840 = vshrl.u32 %v839, 7
      %v841 = vsub.s32 1, %v840
      %v842 = vrot.slane %v833, %v841
      %v845 = vmul.f32 %v830, %v838
      %v846 = vmul.f32 %v831, %v842
      %s847 = scalar_lea.vmem %s6, 10
      %v848 = vld [vmem:[%s847] sm:$0x3]
      %v849 = vpack.c.bf16 %v845, %v845
      %v850 = vpack.c.bf16 %v846, %v846
      %v852 = vsel %vm496, %v848, 0
      %v855 = vsel %vm500, %v849, 0
      %v858 = vsel %vm500, %v850, 0
      %860 = vmatprep.subr.bf16.mxu0 0
      %861 = vmatpush1.bf16.msra.mxu0 0
      %862 = vmatprep.subr.bf16.mxu0 0
      %863 = vmatpush1.bf16.msra.mxu0 0
      %864 = vmatprep.subr.bf16.mxu0 0
      %865 = vmatpush1.bf16.msra.mxu0 0
      %866 = vmatprep.subr.bf16.mxu0 0
      %867 = vmatpush1.bf16.msra.mxu0 0
      %868 = vmatprep.subr.bf16.mxu0 0
      %869 = vmatpush1.bf16.msra.mxu0 0
      %870 = vmatprep.subr.bf16.mxu0 0
      %871 = vmatpush1.bf16.msra.mxu0 0
      %872 = vmatprep.subr.bf16.mxu0 0
      %873 = vmatpush1.bf16.msra.mxu0 0
      %874 = vmatprep.subr.bf16.mxu0 %v858
      %875 = vmatpush1.bf16.msra.mxu0 %v855
      %876 = vmatprep.subr.bf16.mxu0 0
      %877 = vmatpush2.bf16.msra.mxu0 0
      %878 = vmatprep.subr.bf16.mxu0 0
      %879 = vmatpush2.bf16.msra.mxu0 0
      %880 = vmatprep.subr.bf16.mxu0 0
      %881 = vmatpush2.bf16.msra.mxu0 0
      %882 = vmatprep.subr.bf16.mxu0 0
      %883 = vmatpush2.bf16.msra.mxu0 0
      %884 = vmatprep.subr.bf16.mxu0 0
      %885 = vmatpush2.bf16.msra.mxu0 0
      %886 = vmatprep.subr.bf16.mxu0 0
      %887 = vmatpush2.bf16.msra.mxu0 0
      %888 = vmatprep.subr.bf16.mxu0 0
      %889 = vmatpush2.bf16.msra.mxu0 0
      %890 = vmatprep.subr.bf16.mxu0 0
      %891 = vmatpush2.bf16.msra.mxu0 0
      %892 = vmatprep.mubr.bf16.mxu0 0
      %893 = vmatmul.mubr.bf16.gmra.mxu0 %v852
      %v894 = vpop.f32.mrf.mxu0
      %v895 = vadd.f32 0.0, %v894
      %v896 = vpop.f32.mrf.mxu0
      %v897 = vadd.f32 0.0, %v896
      %v898 = vpop.f32.mrf.mxu0
      %v899 = vpop.f32.mrf.mxu0
      %900 = vdwg.mxu0
      %v901 = vadd.f32 %v823, %v895
      %v902 = vadd.f32 %v824, %v897
      %903 = vrot.lane.b32.xlu0 %v442, 113
      %v904 = vpop.permute.xlu0 %903
      %905 = vrot.lane.b32.xlu0 %v443, 113
      %v906 = vpop.permute.xlu0 %905
      %vm907 = vcmp.lt.s32.totalorder %v449, 113
      %v908 = vsel %vm907, %v904, %v906
      %v909 = vsel %vm907, %v906, %v904
      %s910 = scalar_lea.vmem %s1, 12
      %v911 = vld [vmem:[%s910] sm:$0x3]
      %v913 = vlaneseq
      %v914 = vshrl.u32 %v913, 7
      %v915 = vsub.s32 0, %v914
      %v916 = vrot.slane %v911, %v915
      %v917 = vlaneseq
      %v918 = vshrl.u32 %v917, 7
      %v919 = vsub.s32 1, %v918
      %v920 = vrot.slane %v911, %v919
      %v923 = vmul.f32 %v908, %v916
      %v924 = vmul.f32 %v909, %v920
      %s925 = scalar_lea.vmem %s6, 12
      %v926 = vld [vmem:[%s925] sm:$0x3]
      %v927 = vpack.c.bf16 %v923, %v923
      %v928 = vpack.c.bf16 %v924, %v924
      %v930 = vsel %vm496, %v926, 0
      %v933 = vsel %vm500, %v927, 0
      %v936 = vsel %vm500, %v928, 0
      %938 = vmatprep.subr.bf16.mxu0 0
      %939 = vmatpush1.bf16.msra.mxu0 0
      %940 = vmatprep.subr.bf16.mxu0 0
      %941 = vmatpush1.bf16.msra.mxu0 0
      %942 = vmatprep.subr.bf16.mxu0 0
      %943 = vmatpush1.bf16.msra.mxu0 0
      %944 = vmatprep.subr.bf16.mxu0 0
      %945 = vmatpush1.bf16.msra.mxu0 0
      %946 = vmatprep.subr.bf16.mxu0 0
      %947 = vmatpush1.bf16.msra.mxu0 0
      %948 = vmatprep.subr.bf16.mxu0 0
      %949 = vmatpush1.bf16.msra.mxu0 0
      %950 = vmatprep.subr.bf16.mxu0 0
      %951 = vmatpush1.bf16.msra.mxu0 0
      %952 = vmatprep.subr.bf16.mxu0 %v936
      %953 = vmatpush1.bf16.msra.mxu0 %v933
      %954 = vmatprep.subr.bf16.mxu0 0
      %955 = vmatpush2.bf16.msra.mxu0 0
      %956 = vmatprep.subr.bf16.mxu0 0
      %957 = vmatpush2.bf16.msra.mxu0 0
      %958 = vmatprep.subr.bf16.mxu0 0
      %959 = vmatpush2.bf16.msra.mxu0 0
      %960 = vmatprep.subr.bf16.mxu0 0
      %961 = vmatpush2.bf16.msra.mxu0 0
      %962 = vmatprep.subr.bf16.mxu0 0
      %963 = vmatpush2.bf16.msra.mxu0 0
      %964 = vmatprep.subr.bf16.mxu0 0
      %965 = vmatpush2.bf16.msra.mxu0 0
      %966 = vmatprep.subr.bf16.mxu0 0
      %967 = vmatpush2.bf16.msra.mxu0 0
      %968 = vmatprep.subr.bf16.mxu0 0
      %969 = vmatpush2.bf16.msra.mxu0 0
      %970 = vmatprep.mubr.bf16.mxu0 0
      %971 = vmatmul.mubr.bf16.gmra.mxu0 %v930
      %v972 = vpop.f32.mrf.mxu0
      %v973 = vadd.f32 0.0, %v972
      %v974 = vpop.f32.mrf.mxu0
      %v975 = vadd.f32 0.0, %v974
      %v976 = vpop.f32.mrf.mxu0
      %v977 = vpop.f32.mrf.mxu0
      %978 = vdwg.mxu0
      %v979 = vadd.f32 %v901, %v973
      %v980 = vadd.f32 %v902, %v975
      %981 = vrot.lane.b32.xlu0 %v442, 112
      %v982 = vpop.permute.xlu0 %981
      %983 = vrot.lane.b32.xlu0 %v443, 112
      %v984 = vpop.permute.xlu0 %983
      %vm985 = vcmp.lt.s32.totalorder %v449, 112
      %v986 = vsel %vm985, %v982, %v984
      %v987 = vsel %vm985, %v984, %v982
      %s988 = scalar_lea.vmem %s1, 14
      %v989 = vld [vmem:[%s988] sm:$0x3]
      %v991 = vlaneseq
      %v992 = vshrl.u32 %v991, 7
      %v993 = vsub.s32 0, %v992
      %v994 = vrot.slane %v989, %v993
      %v995 = vlaneseq
      %v996 = vshrl.u32 %v995, 7
      %v997 = vsub.s32 1, %v996
      %v998 = vrot.slane %v989, %v997
      %v1001 = vmul.f32 %v986, %v994
      %v1002 = vmul.f32 %v987, %v998
      %s1003 = scalar_lea.vmem %s6, 14
      %v1004 = vld [vmem:[%s1003] sm:$0x3]
      %v1005 = vpack.c.bf16 %v1001, %v1001
      %v1006 = vpack.c.bf16 %v1002, %v1002
      %v1008 = vsel %vm496, %v1004, 0
      %v1011 = vsel %vm500, %v1005, 0
      %v1014 = vsel %vm500, %v1006, 0
      %1016 = vmatprep.subr.bf16.mxu0 0
      %1017 = vmatpush1.bf16.msra.mxu0 0
      %1018 = vmatprep.subr.bf16.mxu0 0
      %1019 = vmatpush1.bf16.msra.mxu0 0
      %1020 = vmatprep.subr.bf16.mxu0 0
      %1021 = vmatpush1.bf16.msra.mxu0 0
      %1022 = vmatprep.subr.bf16.mxu0 0
      %1023 = vmatpush1.bf16.msra.mxu0 0
      %1024 = vmatprep.subr.bf16.mxu0 0
      %1025 = vmatpush1.bf16.msra.mxu0 0
      %1026 = vmatprep.subr.bf16.mxu0 0
      %1027 = vmatpush1.bf16.msra.mxu0 0
      %1028 = vmatprep.subr.bf16.mxu0 0
      %1029 = vmatpush1.bf16.msra.mxu0 0
      %1030 = vmatprep.subr.bf16.mxu0 %v1014
      %1031 = vmatpush1.bf16.msra.mxu0 %v1011
      %1032 = vmatprep.subr.bf16.mxu0 0
      %1033 = vmatpush2.bf16.msra.mxu0 0
      %1034 = vmatprep.subr.bf16.mxu0 0
      %1035 = vmatpush2.bf16.msra.mxu0 0
      %1036 = vmatprep.subr.bf16.mxu0 0
      %1037 = vmatpush2.bf16.msra.mxu0 0
      %1038 = vmatprep.subr.bf16.mxu0 0
      %1039 = vmatpush2.bf16.msra.mxu0 0
      %1040 = vmatprep.subr.bf16.mxu0 0
      %1041 = vmatpush2.bf16.msra.mxu0 0
      %1042 = vmatprep.subr.bf16.mxu0 0
      %1043 = vmatpush2.bf16.msra.mxu0 0
      %1044 = vmatprep.subr.bf16.mxu0 0
      %1045 = vmatpush2.bf16.msra.mxu0 0
      %1046 = vmatprep.subr.bf16.mxu0 0
      %1047 = vmatpush2.bf16.msra.mxu0 0
      %1048 = vmatprep.mubr.bf16.mxu0 0
      %1049 = vmatmul.mubr.bf16.gmra.mxu0 %v1008
      %v1050 = vpop.f32.mrf.mxu0
      %v1051 = vadd.f32 0.0, %v1050
      %v1052 = vpop.f32.mrf.mxu0
      %v1053 = vadd.f32 0.0, %v1052
      %v1054 = vpop.f32.mrf.mxu0
      %v1055 = vpop.f32.mrf.mxu0
      %1056 = vdwg.mxu0
      %v1057 = vadd.f32 %v979, %v1051
      %v1058 = vadd.f32 %v980, %v1053
      %1059 = vrot.lane.b32.xlu0 %v442, 111
      %v1060 = vpop.permute.xlu0 %1059
      %1061 = vrot.lane.b32.xlu0 %v443, 111
      %v1062 = vpop.permute.xlu0 %1061
      %vm1063 = vcmp.lt.s32.totalorder %v449, 111
      %v1064 = vsel %vm1063, %v1060, %v1062
      %v1065 = vsel %vm1063, %v1062, %v1060
      %s1066 = scalar_lea.vmem %s1, 16
      %v1067 = vld [vmem:[%s1066] sm:$0x3]
      %v1069 = vlaneseq
      %v1070 = vshrl.u32 %v1069, 7
      %v1071 = vsub.s32 0, %v1070
      %v1072 = vrot.slane %v1067, %v1071
      %v1073 = vlaneseq
      %v1074 = vshrl.u32 %v1073, 7
      %v1075 = vsub.s32 1, %v1074
      %v1076 = vrot.slane %v1067, %v1075
      %v1079 = vmul.f32 %v1064, %v1072
      %v1080 = vmul.f32 %v1065, %v1076
      %s1081 = scalar_lea.vmem %s6, 16
      %v1082 = vld [vmem:[%s1081] sm:$0x3]
      %v1083 = vpack.c.bf16 %v1079, %v1079
      %v1084 = vpack.c.bf16 %v1080, %v1080
      %v1086 = vsel %vm496, %v1082, 0
      %v1089 = vsel %vm500, %v1083, 0
      %v1092 = vsel %vm500, %v1084, 0
      %1094 = vmatprep.subr.bf16.mxu0 0
      %1095 = vmatpush1.bf16.msra.mxu0 0
      %1096 = vmatprep.subr.bf16.mxu0 0
      %1097 = vmatpush1.bf16.msra.mxu0 0
      %1098 = vmatprep.subr.bf16.mxu0 0
      %1099 = vmatpush1.bf16.msra.mxu0 0
      %1100 = vmatprep.subr.bf16.mxu0 0
      %1101 = vmatpush1.bf16.msra.mxu0 0
      %1102 = vmatprep.subr.bf16.mxu0 0
      %1103 = vmatpush1.bf16.msra.mxu0 0
      %1104 = vmatprep.subr.bf16.mxu0 0
      %1105 = vmatpush1.bf16.msra.mxu0 0
      %1106 = vmatprep.subr.bf16.mxu0 0
      %1107 = vmatpush1.bf16.msra.mxu0 0
      %1108 = vmatprep.subr.bf16.mxu0 %v1092
      %1109 = vmatpush1.bf16.msra.mxu0 %v1089
      %1110 = vmatprep.subr.bf16.mxu0 0
      %1111 = vmatpush2.bf16.msra.mxu0 0
      %1112 = vmatprep.subr.bf16.mxu0 0
      %1113 = vmatpush2.bf16.msra.mxu0 0
      %1114 = vmatprep.subr.bf16.mxu0 0
      %1115 = vmatpush2.bf16.msra.mxu0 0
      %1116 = vmatprep.subr.bf16.mxu0 0
      %1117 = vmatpush2.bf16.msra.mxu0 0
      %1118 = vmatprep.subr.bf16.mxu0 0
      %1119 = vmatpush2.bf16.msra.mxu0 0
      %1120 = vmatprep.subr.bf16.mxu0 0
      %1121 = vmatpush2.bf16.msra.mxu0 0
      %1122 = vmatprep.subr.bf16.mxu0 0
      %1123 = vmatpush2.bf16.msra.mxu0 0
      %1124 = vmatprep.subr.bf16.mxu0 0
      %1125 = vmatpush2.bf16.msra.mxu0 0
      %1126 = vmatprep.mubr.bf16.mxu0 0
      %1127 = vmatmul.mubr.bf16.gmra.mxu0 %v1086
      %v1128 = vpop.f32.mrf.mxu0
      %v1129 = vadd.f32 0.0, %v1128
      %v1130 = vpop.f32.mrf.mxu0
      %v1131 = vadd.f32 0.0, %v1130
      %v1132 = vpop.f32.mrf.mxu0
      %v1133 = vpop.f32.mrf.mxu0
      %1134 = vdwg.mxu0
      %v1135 = vadd.f32 %v1057, %v1129
      %v1136 = vadd.f32 %v1058, %v1131
      %v1137 = vld [vmem:[%s7] sm:$0xf]
      %1139 = vset.pattern.permute.xlu0 0
      %1140 = vperm.xlu0 %1139, %v1137
      %v1141 = vpop.permute.xlu0 %1140
      %v1143 = vadd.f32 %v1135, %v1141
      %v1144 = vadd.f32 %v1136, %v1141
      %v1145 = vmax.f32 %v1143, 0.0
      %v1146 = vmax.f32 %v1144, 0.0
      %v1147 = vld [vmem:[%s8] sm:$0xf]
      %v1148 = vpack.c.bf16 %v1145, %v1145
      %v1149 = vpack.c.bf16 %v1146, %v1146
      %v1150 = vld [vmem:[%s9] sm:$0xff]
      %1152 = vset.pattern.permute.xlu0 0
      %1153 = vperm.xlu0 %1152, %v1150
      %v1154 = vpop.permute.xlu0 %1153
      %v1157 = vsel %vm496, %v1147, 0
      %v1160 = vsel %vm500, %v1148, 0
      %v1163 = vsel %vm500, %v1149, 0
      %1165 = vmatprep.subr.bf16.mxu0 0
      %1166 = vmatpush1.bf16.msra.mxu0 0
      %1167 = vmatprep.subr.bf16.mxu0 0
      %1168 = vmatpush1.bf16.msra.mxu0 0
      %1169 = vmatprep.subr.bf16.mxu0 0
      %1170 = vmatpush1.bf16.msra.mxu0 0
      %1171 = vmatprep.subr.bf16.mxu0 0
      %1172 = vmatpush1.bf16.msra.mxu0 0
      %1173 = vmatprep.subr.bf16.mxu0 0
      %1174 = vmatpush1.bf16.msra.mxu0 0
      %1175 = vmatprep.subr.bf16.mxu0 0
      %1176 = vmatpush1.bf16.msra.mxu0 0
      %1177 = vmatprep.subr.bf16.mxu0 0
      %1178 = vmatpush1.bf16.msra.mxu0 0
      %1179 = vmatprep.subr.bf16.mxu0 %v1163
      %1180 = vmatpush1.bf16.msra.mxu0 %v1160
      %1181 = vmatprep.subr.bf16.mxu0 0
      %1182 = vmatpush2.bf16.msra.mxu0 0
      %1183 = vmatprep.subr.bf16.mxu0 0
      %1184 = vmatpush2.bf16.msra.mxu0 0
      %1185 = vmatprep.subr.bf16.mxu0 0
      %1186 = vmatpush2.bf16.msra.mxu0 0
      %1187 = vmatprep.subr.bf16.mxu0 0
      %1188 = vmatpush2.bf16.msra.mxu0 0
      %1189 = vmatprep.subr.bf16.mxu0 0
      %1190 = vmatpush2.bf16.msra.mxu0 0
      %1191 = vmatprep.subr.bf16.mxu0 0
      %1192 = vmatpush2.bf16.msra.mxu0 0
      %1193 = vmatprep.subr.bf16.mxu0 0
      %1194 = vmatpush2.bf16.msra.mxu0 0
      %1195 = vmatprep.subr.bf16.mxu0 0
      %1196 = vmatpush2.bf16.msra.mxu0 0
      %1197 = vmatprep.mubr.bf16.mxu0 0
      %1198 = vmatmul.mubr.bf16.gmra.mxu0 %v1157
      %v1199 = vpop.f32.mrf.mxu0
      %v1200 = vadd.f32 %v1154, %v1199
      %v1201 = vpop.f32.mrf.mxu0
      %v1202 = vadd.f32 %v1154, %v1201
      %v1203 = vpop.f32.mrf.mxu0
      %v1204 = vpop.f32.mrf.mxu0
      %1205 = vdwg.mxu0
      %v1206 = vadd.f32 %v1200, %v361
      %v1207 = vadd.f32 %v1202, %v362
      %1208 = vst [vmem:[%s359] sm:$0xff] %v1206
      %1209 = vst [vmem:[%s359 + $0x8] sm:$0xff] %v1207
      %p1210 = scmp.lt.s32.totalorder %s21, 1
      %s1211 = scalar_select %p1210, %s21, 1
      %s1212 = smul.addr %s1211, 2
      %s1213 = smul.addr %s1212, 8
      %s1214 = scalar_lea.vmem %s10, %s1213
      // Predicated region
      $region61: #{bottleneck2d_forward.1} parent=59 // pred_check
        %p1215 = pneg %p254
      $region62: #{bottleneck2d_forward.1} parent=59 // pred_check_branch
        %1217 = sbr.rel (%p1215) target = $region64
      $region63: #{bottleneck2d_forward.1} parent=59 // pred_region
        _
      $region64: #{bottleneck2d_forward.1} parent=59 // pred_fallthru
        _
    $region60: #{bottleneck2d_forward.1} parent=5 // pred_fallthru
      _
    %p1218 = scmp.le.s32.totalorder 2, %s16
    // Predicated region
    $region65: #{bottleneck2d_forward.1} parent=5 // pred_check
      %p1219 = pneg %p1218
    $region66: #{bottleneck2d_forward.1} parent=5 // pred_check_branch
      %1221 = sbr.rel (%p1219) target = $region68
    $region67: #{bottleneck2d_forward.1} parent=5 // pred_region
      %s1222 = ssub.s32 %s16, 2
      // Predicated region
      $region69: #{bottleneck2d_forward.1} parent=67 // pred_check
        %p1223 = pneg %p260
      $region70: #{bottleneck2d_forward.1} parent=67 // pred_check_branch
        %1225 = sbr.rel (%p1223) target = $region72
      $region71: #{bottleneck2d_forward.1} parent=67 // pred_region
        %p1226 = scmp.lt.s32.totalorder %s22, 1
        %s1227 = scalar_select %p1226, %s22, 1
        %s1228 = smul.addr %s1227, 2
        %s1229 = smul.addr %s1228, 8
        %s1230 = scalar_lea.vmem %s10, %s1229
      $region72: #{bottleneck2d_forward.1} parent=67 // pred_fallthru
        _
    $region68: #{bottleneck2d_forward.1} parent=5 // pred_fallthru
      _
  $region6: #{bottleneck2d_forward.1} parent=0 // loop_footer
    %s20 = sadd.s32 1, %s16
  $region7: #{bottleneck2d_forward.1} parent=0 // loop_footer_branch
    %15 = sbr.rel target = $region3
  $region8: #{bottleneck2d_forward.1} parent=0 // loop_exit
    _

</llo_original>
